<compile_context>
chip_gen: v5e
topology: v5e:2x2
jax: 0.10.0
libtpu: 0.0.40
codegen_flags: <defaults>
</compile_context>

<pallas_src>
import jax
import jax.numpy as jnp
from jax import lax
from jax.experimental import pallas as pl
from jax.experimental.pallas import tpu as pltpu

LEAKY_GNN = 0.01   # F.leaky_relu default (after each conv layer and in the MLP head)
LEAKY_ATT = 0.2    # GATConv attention negative_slope

# (relation, src_type, dst_type) of the hetero metadata used in select_model('gat')
RELATIONS = [
    ("access", "Process", "File"),
    ("rev_access", "File", "Process"),
    ("same_as", "Process", "File"),
    ("rev_same_as", "File", "Process"),
    ("bind", "Process", "Port"),
    ("rev_bind", "Port", "Process"),
    ("session", "Port", "Port"),
    ("rev_session", "Port", "Port"),
    ("create", "Process", "Process"),
    ("rev_create", "Process", "Process"),
]

NODE_TYPES = ["Process", "File", "Port"]


def _leaky(x, slope):
    return jnp.where(x > 0, x, slope * x)


# ----------------------------------------------------------------------------
# Fused Pallas kernel: full HGNN_zs forward
# ----------------------------------------------------------------------------
def _hgnn_fused_kernel(x_ref, adj_ref, invc_ref, onehot_ref,
                       wg1_ref, as1_ref, ad1_ref, bg1_ref,
                       wg2_ref, as2_ref, ad2_ref, bg2_ref,
                       wl1_ref, bl1_ref, wl2_ref, bl2_ref,
                       wo_ref, bo_ref, o_ref):
    n_rel = adj_ref.shape[0]

    # Union of relation adjacencies (shared by both layers, adjacency is static
    # across layers).  Used so exp() is evaluated once per layer.
    union = adj_ref[0]
    for r in range(1, n_rel):
        union = union + adj_ref[r]
    mask = union > 0.0
    invc = invc_ref[...]                                      # [N,1] 1/#rels per dst type

    def gat_hetero_layer(x, w, a_src, a_dst, bias):
        # Shared projection: once per node, not per relation (20 -> 1 dots/layer).
        h = jnp.dot(x, w, preferred_element_type=jnp.float32)            # [N,H]
        u = lax.dot_general(h, a_dst, (((1,), (1,)), ((), ())),
                            preferred_element_type=jnp.float32)          # [N,1] dst score
        v = lax.dot_general(a_src, h, (((1,), (1,)), ((), ())),
                            preferred_element_type=jnp.float32)          # [1,N] src score (row)
        e = _leaky(u + v, LEAKY_ATT)                                      # [N,N] e[i,j]=u_i+v_j
        e = jnp.where(mask, e, -1e30)                                     # mask once (union)
        m = jnp.max(e, axis=-1, keepdims=True)                            # shift (softmax-invariant)
        p_all = jnp.exp(e - m)                                            # exp computed once

        # Per-relation masked softmax; only mask / row-sum / reciprocal differ.
        alpha_sum = jnp.zeros_like(p_all)
        for r in range(n_rel):
            p = p_all * adj_ref[r]                                        # adj in {0,1}
            d = jnp.sum(p, axis=-1, keepdims=True)
            alpha_sum = alpha_sum + p * pl.reciprocal(jnp.maximum(d, 1e-20),
                                                      approx=True)
        # Single MXU matmul aggregates all 10 relations at once.
        msg = jnp.dot(alpha_sum, h, preferred_element_type=jnp.float32)   # [N,H]
        # HeteroConv aggr='mean' (per-dst-type relation count) + GAT bias + leaky.
        return _leaky(msg * invc + bias, LEAKY_GNN)

    x = gat_hetero_layer(x_ref[...], wg1_ref[...], as1_ref[...], ad1_ref[...], bg1_ref[...])
    x = gat_hetero_layer(x, wg2_ref[...], as2_ref[...], ad2_ref[...], bg2_ref[...])

    # pool_type == 1: global_add_pool over concatenated node types (one-hot matmul)
    pooled = jnp.dot(onehot_ref[...], x, preferred_element_type=jnp.float32)     # [G,2h]
    r1 = _leaky(jnp.dot(pooled, wl1_ref[...], preferred_element_type=jnp.float32)
                + bl1_ref[...], LEAKY_GNN)
    r2 = _leaky(jnp.dot(r1, wl2_ref[...], preferred_element_type=jnp.float32)
                + bl2_ref[...], LEAKY_GNN)
    res = r2 + pooled
    # TODO(synk): nn.Dropout(p=0.5) is identity in eval mode; training-mode masking not modeled.
    o_ref[...] = jnp.dot(res, wo_ref[...], preferred_element_type=jnp.float32) + bo_ref[...]


def hgnn_zs_forward(x_all, adj_stack, inv_cnt, onehot, params):
    """One pallas_call for the whole forward pass."""
    (wg1, as1, ad1, bg1), (wg2, as2, ad2, bg2) = params["convs"]
    args = (x_all, adj_stack, inv_cnt, onehot,
            wg1, as1, ad1, bg1, wg2, as2, ad2, bg2,
            params["w1"], params["b1"], params["w2"], params["b2"],
            params["wo"], params["bo"])

    out_shape = jax.ShapeDtypeStruct((onehot.shape[0], params["wo"].shape[1]), jnp.float32)
    in_specs = [pl.BlockSpec(a.shape, lambda i, nd=a.ndim: (0,) * nd) for a in args]
    out_spec = pl.BlockSpec(out_shape.shape, lambda i: (0, 0))

    return pl.pallas_call(
        _hgnn_fused_kernel,
        grid=(1,),
        in_specs=in_specs,
        out_specs=out_spec,
        out_shape=out_shape,
        compiler_params=pltpu.CompilerParams(dimension_semantics=("arbitrary",)),
    )(*args)


# ----------------------------------------------------------------------------
# Parameter / input construction (plain JAX, outside the kernel)
# ----------------------------------------------------------------------------
def init_params(key, feat_in, hidden_channels, out_channels, num_layers=2):
    h2 = 2 * hidden_channels
    keys = jax.random.split(key, 3 * num_layers + 3)
    ki = 0

    convs = []
    dim = feat_in
    for _ in range(num_layers):
        w = jax.random.uniform(keys[ki], (dim, h2), minval=-0.1, maxval=0.1); ki += 1
        a_src = jax.random.uniform(keys[ki], (1, h2), minval=-0.1, maxval=0.1); ki += 1
        a_dst = jax.random.uniform(keys[ki], (1, h2), minval=-0.1, maxval=0.1); ki += 1
        bias = jnp.zeros((1, h2), jnp.float32)
        convs.append((w, a_src, a_dst, bias))
        dim = h2

    # init_weights(): lin / out weights ~ U(-0.1, 0.1), biases zero
    w1 = jax.random.uniform(keys[ki], (h2, hidden_channels), minval=-0.1, maxval=0.1); ki += 1
    w2 = jax.random.uniform(keys[ki], (hidden_channels, h2), minval=-0.1, maxval=0.1); ki += 1
    wo = jax.random.uniform(keys[ki], (h2, out_channels), minval=-0.1, maxval=0.1); ki += 1

    return {
        "convs": convs,
        "w1": w1, "b1": jnp.zeros((1, hidden_channels), jnp.float32),
        "w2": w2, "b2": jnp.zeros((1, h2), jnp.float32),
        "wo": wo, "bo": jnp.zeros((1, out_channels), jnp.float32),
    }


def make_block_adj(key, src_t, dst_t, n_per_type, batch_all, p=0.3):
    """Dense adjacency adj[dst, src] in GLOBAL node coordinates for one relation."""
    n_total = len(NODE_TYPES) * n_per_type
    si = NODE_TYPES.index(src_t) * n_per_type
    di = NODE_TYPES.index(dst_t) * n_per_type
    block = jax.random.bernoulli(key, p, (n_per_type, n_per_type)).astype(jnp.float32)
    adj = jnp.zeros((n_total, n_total), jnp.float32)
    adj = adj.at[di:di + n_per_type, si:si + n_per_type].set(block)
    same_graph = (batch_all[:, None] == batch_all[None, :]).astype(jnp.float32)
    return adj * same_graph


if __name__ == "__main__":
    key = jax.random.PRNGKey(0)

    # module-consistent sizes (hidden_channels=64 -> conv width 128; out=384)
    FEAT_IN = 16
    HIDDEN = 64
    OUT_CH = 384
    N_PER_TYPE = 16
    NUM_GRAPHS = 2

    k_feat, k_adj, k_par = jax.random.split(key, 3)

    # Node features per type, concatenated into one slab [3N, F]
    fkeys = jax.random.split(k_feat, len(NODE_TYPES))
    x_all = jnp.concatenate(
        [jax.random.normal(fk, (N_PER_TYPE, FEAT_IN), dtype=jnp.float32) for fk in fkeys],
        axis=0)

    # batch assignment: per type, first half -> graph 0, second half -> graph 1
    batch_type = jnp.concatenate(
        [jnp.zeros((N_PER_TYPE // 2,), jnp.int32), jnp.ones((N_PER_TYPE // 2,), jnp.int32)])
    batch_all = jnp.concatenate([batch_type for _ in NODE_TYPES], axis=0)           # [3N]

    # Stacked per-relation dense adjacencies in global coords: [10, 3N, 3N]
    akeys = jax.random.split(k_adj, len(RELATIONS))
    adj_stack = jnp.stack(
        [make_block_adj(ak, src, dst, N_PER_TYPE, batch_all)
         for (rel, src, dst), ak in zip(RELATIONS, akeys)], axis=0)

    # HeteroConv aggr='mean' divisor per destination node (by its node type)
    dst_counts = {}
    for _, _, dst in RELATIONS:
        dst_counts[dst] = dst_counts.get(dst, 0) + 1
    inv_cnt = jnp.concatenate(
        [jnp.full((N_PER_TYPE, 1), 1.0 / dst_counts[t], jnp.float32) for t in NODE_TYPES],
        axis=0)                                                                      # [3N, 1]

    # global_add_pool one-hot selector [G, 3N]
    onehot = (batch_all[None, :] == jnp.arange(NUM_GRAPHS)[:, None]).astype(jnp.float32)

    params = init_params(k_par, FEAT_IN, HIDDEN, OUT_CH, num_layers=2)

    out = hgnn_zs_forward(x_all, adj_stack, inv_cnt, onehot, params)
    out = jax.block_until_ready(out)
    assert out.shape == (NUM_GRAPHS, OUT_CH) and out.dtype == jnp.float32
    assert bool(jnp.all(jnp.isfinite(out)))
    print("KERNEL_OK")
</pallas_src>

<mosaic_0001>
module attributes {stable_mosaic.version = 11 : i64} {
  func.func @_hgnn_fused_kernel(%arg0: i32, %arg1: memref<48x16xf32, #tpu.memory_space<vmem>>, %arg2: memref<10x48x48xf32, #tpu.memory_space<vmem>>, %arg3: memref<48x1xf32, #tpu.memory_space<vmem>>, %arg4: memref<2x48xf32, #tpu.memory_space<vmem>>, %arg5: memref<16x128xf32, #tpu.memory_space<vmem>>, %arg6: memref<1x128xf32, #tpu.memory_space<vmem>>, %arg7: memref<1x128xf32, #tpu.memory_space<vmem>>, %arg8: memref<1x128xf32, #tpu.memory_space<vmem>>, %arg9: memref<128x128xf32, #tpu.memory_space<vmem>>, %arg10: memref<1x128xf32, #tpu.memory_space<vmem>>, %arg11: memref<1x128xf32, #tpu.memory_space<vmem>>, %arg12: memref<1x128xf32, #tpu.memory_space<vmem>>, %arg13: memref<128x64xf32, #tpu.memory_space<vmem>>, %arg14: memref<1x64xf32, #tpu.memory_space<vmem>>, %arg15: memref<64x128xf32, #tpu.memory_space<vmem>>, %arg16: memref<1x128xf32, #tpu.memory_space<vmem>>, %arg17: memref<128x384xf32, #tpu.memory_space<vmem>>, %arg18: memref<1x384xf32, #tpu.memory_space<vmem>>, %arg19: memref<2x384xf32, #tpu.memory_space<vmem>>) attributes {dimension_semantics = [#tpu.dimension_semantics<arbitrary>], iteration_bounds = array<i64: 1>, scalar_prefetch = 0 : i64, scratch_operands = 0 : i64, tpu.core_type = #tpu.core_type<tc>, window_params = [{pipeline_mode = #tpu.pipeline_mode<synchronous>, transform_indices = @transform_0, window_bounds = array<i64: 48, 16>}, {pipeline_mode = #tpu.pipeline_mode<synchronous>, transform_indices = @transform_1, window_bounds = array<i64: 10, 48, 48>}, {pipeline_mode = #tpu.pipeline_mode<synchronous>, transform_indices = @transform_2, window_bounds = array<i64: 48, 1>}, {pipeline_mode = #tpu.pipeline_mode<synchronous>, transform_indices = @transform_3, window_bounds = array<i64: 2, 48>}, {pipeline_mode = #tpu.pipeline_mode<synchronous>, transform_indices = @transform_4, window_bounds = array<i64: 16, 128>}, {pipeline_mode = #tpu.pipeline_mode<synchronous>, transform_indices = @transform_5, window_bounds = array<i64: 1, 128>}, {pipeline_mode = #tpu.pipeline_mode<synchronous>, transform_indices = @transform_6, window_bounds = array<i64: 1, 128>}, {pipeline_mode = #tpu.pipeline_mode<synchronous>, transform_indices = @transform_7, window_bounds = array<i64: 1, 128>}, {pipeline_mode = #tpu.pipeline_mode<synchronous>, transform_indices = @transform_8, window_bounds = array<i64: 128, 128>}, {pipeline_mode = #tpu.pipeline_mode<synchronous>, transform_indices = @transform_9, window_bounds = array<i64: 1, 128>}, {pipeline_mode = #tpu.pipeline_mode<synchronous>, transform_indices = @transform_10, window_bounds = array<i64: 1, 128>}, {pipeline_mode = #tpu.pipeline_mode<synchronous>, transform_indices = @transform_11, window_bounds = array<i64: 1, 128>}, {pipeline_mode = #tpu.pipeline_mode<synchronous>, transform_indices = @transform_12, window_bounds = array<i64: 128, 64>}, {pipeline_mode = #tpu.pipeline_mode<synchronous>, transform_indices = @transform_13, window_bounds = array<i64: 1, 64>}, {pipeline_mode = #tpu.pipeline_mode<synchronous>, transform_indices = @transform_14, window_bounds = array<i64: 64, 128>}, {pipeline_mode = #tpu.pipeline_mode<synchronous>, transform_indices = @transform_15, window_bounds = array<i64: 1, 128>}, {pipeline_mode = #tpu.pipeline_mode<synchronous>, transform_indices = @transform_16, window_bounds = array<i64: 128, 384>}, {pipeline_mode = #tpu.pipeline_mode<synchronous>, transform_indices = @transform_17, window_bounds = array<i64: 1, 384>}, {pipeline_mode = #tpu.pipeline_mode<synchronous>, transform_indices = @transform_18, window_bounds = array<i64: 2, 384>}]} {
    %c0 = arith.constant 0 : index
    %c0_0 = arith.constant 0 : index
    %c0_1 = arith.constant 0 : index
    %0 = vector.load %arg2[%c0, %c0_0, %c0_1] : memref<10x48x48xf32, #tpu.memory_space<vmem>>, vector<1x48x48xf32>
    %1 = vector.shape_cast %0 : vector<1x48x48xf32> to vector<48x48xf32>
    %c1 = arith.constant 1 : index
    %c0_2 = arith.constant 0 : index
    %c0_3 = arith.constant 0 : index
    %2 = vector.load %arg2[%c1, %c0_2, %c0_3] : memref<10x48x48xf32, #tpu.memory_space<vmem>>, vector<1x48x48xf32>
    %3 = vector.shape_cast %2 : vector<1x48x48xf32> to vector<48x48xf32>
    %4 = arith.addf %1, %3 : vector<48x48xf32>
    %c2 = arith.constant 2 : index
    %c0_4 = arith.constant 0 : index
    %c0_5 = arith.constant 0 : index
    %5 = vector.load %arg2[%c2, %c0_4, %c0_5] : memref<10x48x48xf32, #tpu.memory_space<vmem>>, vector<1x48x48xf32>
    %6 = vector.shape_cast %5 : vector<1x48x48xf32> to vector<48x48xf32>
    %7 = arith.addf %4, %6 : vector<48x48xf32>
    %c3 = arith.constant 3 : index
    %c0_6 = arith.constant 0 : index
    %c0_7 = arith.constant 0 : index
    %8 = vector.load %arg2[%c3, %c0_6, %c0_7] : memref<10x48x48xf32, #tpu.memory_space<vmem>>, vector<1x48x48xf32>
    %9 = vector.shape_cast %8 : vector<1x48x48xf32> to vector<48x48xf32>
    %10 = arith.addf %7, %9 : vector<48x48xf32>
    %c4 = arith.constant 4 : index
    %c0_8 = arith.constant 0 : index
    %c0_9 = arith.constant 0 : index
    %11 = vector.load %arg2[%c4, %c0_8, %c0_9] : memref<10x48x48xf32, #tpu.memory_space<vmem>>, vector<1x48x48xf32>
    %12 = vector.shape_cast %11 : vector<1x48x48xf32> to vector<48x48xf32>
    %13 = arith.addf %10, %12 : vector<48x48xf32>
    %c5 = arith.constant 5 : index
    %c0_10 = arith.constant 0 : index
    %c0_11 = arith.constant 0 : index
    %14 = vector.load %arg2[%c5, %c0_10, %c0_11] : memref<10x48x48xf32, #tpu.memory_space<vmem>>, vector<1x48x48xf32>
    %15 = vector.shape_cast %14 : vector<1x48x48xf32> to vector<48x48xf32>
    %16 = arith.addf %13, %15 : vector<48x48xf32>
    %c6 = arith.constant 6 : index
    %c0_12 = arith.constant 0 : index
    %c0_13 = arith.constant 0 : index
    %17 = vector.load %arg2[%c6, %c0_12, %c0_13] : memref<10x48x48xf32, #tpu.memory_space<vmem>>, vector<1x48x48xf32>
    %18 = vector.shape_cast %17 : vector<1x48x48xf32> to vector<48x48xf32>
    %19 = arith.addf %16, %18 : vector<48x48xf32>
    %c7 = arith.constant 7 : index
    %c0_14 = arith.constant 0 : index
    %c0_15 = arith.constant 0 : index
    %20 = vector.load %arg2[%c7, %c0_14, %c0_15] : memref<10x48x48xf32, #tpu.memory_space<vmem>>, vector<1x48x48xf32>
    %21 = vector.shape_cast %20 : vector<1x48x48xf32> to vector<48x48xf32>
    %22 = arith.addf %19, %21 : vector<48x48xf32>
    %c8 = arith.constant 8 : index
    %c0_16 = arith.constant 0 : index
    %c0_17 = arith.constant 0 : index
    %23 = vector.load %arg2[%c8, %c0_16, %c0_17] : memref<10x48x48xf32, #tpu.memory_space<vmem>>, vector<1x48x48xf32>
    %24 = vector.shape_cast %23 : vector<1x48x48xf32> to vector<48x48xf32>
    %25 = arith.addf %22, %24 : vector<48x48xf32>
    %c9 = arith.constant 9 : index
    %c0_18 = arith.constant 0 : index
    %c0_19 = arith.constant 0 : index
    %26 = vector.load %arg2[%c9, %c0_18, %c0_19] : memref<10x48x48xf32, #tpu.memory_space<vmem>>, vector<1x48x48xf32>
    %27 = vector.shape_cast %26 : vector<1x48x48xf32> to vector<48x48xf32>
    %28 = arith.addf %25, %27 : vector<48x48xf32>
    %cst = arith.constant 0.000000e+00 : f32
    %29 = vector.broadcast %cst : f32 to vector<48x48xf32>
    %30 = arith.cmpf ogt, %28, %29 : vector<48x48xf32>
    %c0_20 = arith.constant 0 : index
    %c0_21 = arith.constant 0 : index
    %31 = vector.load %arg3[%c0_20, %c0_21] : memref<48x1xf32, #tpu.memory_space<vmem>>, vector<48x1xf32>
    %c0_22 = arith.constant 0 : index
    %c0_23 = arith.constant 0 : index
    %32 = vector.load %arg1[%c0_22, %c0_23] : memref<48x16xf32, #tpu.memory_space<vmem>>, vector<48x16xf32>
    %c0_24 = arith.constant 0 : index
    %c0_25 = arith.constant 0 : index
    %33 = vector.load %arg5[%c0_24, %c0_25] : memref<16x128xf32, #tpu.memory_space<vmem>>, vector<16x128xf32>
    %c0_26 = arith.constant 0 : index
    %c0_27 = arith.constant 0 : index
    %34 = vector.load %arg6[%c0_26, %c0_27] : memref<1x128xf32, #tpu.memory_space<vmem>>, vector<1x128xf32>
    %c0_28 = arith.constant 0 : index
    %c0_29 = arith.constant 0 : index
    %35 = vector.load %arg7[%c0_28, %c0_29] : memref<1x128xf32, #tpu.memory_space<vmem>>, vector<1x128xf32>
    %c0_30 = arith.constant 0 : index
    %c0_31 = arith.constant 0 : index
    %36 = vector.load %arg8[%c0_30, %c0_31] : memref<1x128xf32, #tpu.memory_space<vmem>>, vector<1x128xf32>
    %cst_32 = arith.constant dense<0.000000e+00> : vector<48x128xf32>
    %37 = tpu.matmul %32, %33, %cst_32 {dimension_numbers = #tpu.dot_dimension_numbers<[1], [0], [0], [1], [0, 0, 1, 1], [], []>} : vector<48x16xf32>, vector<16x128xf32>, vector<48x128xf32> -> vector<48x128xf32>
    %cst_33 = arith.constant dense<0.000000e+00> : vector<48x1xf32>
    %38 = tpu.matmul %37, %35, %cst_33 {dimension_numbers = #tpu.dot_dimension_numbers<[1], [1], [0], [0], [0, 0, 1, 0], [], []>} : vector<48x128xf32>, vector<1x128xf32>, vector<48x1xf32> -> vector<48x1xf32>
    %cst_34 = arith.constant dense<0.000000e+00> : vector<1x48xf32>
    %39 = tpu.matmul %34, %37, %cst_34 {dimension_numbers = #tpu.dot_dimension_numbers<[1], [1], [0], [0], [0, 0, 1, 0], [], []>} : vector<1x128xf32>, vector<48x128xf32>, vector<1x48xf32> -> vector<1x48xf32>
    %40 = vector.broadcast %38 : vector<48x1xf32> to vector<48x48xf32>
    %41 = vector.broadcast %39 : vector<1x48xf32> to vector<48x48xf32>
    %42 = arith.addf %40, %41 : vector<48x48xf32>
    %cst_35 = arith.constant 0.000000e+00 : f32
    %43 = vector.broadcast %cst_35 : f32 to vector<48x48xf32>
    %44 = arith.cmpf ogt, %42, %43 : vector<48x48xf32>
    %cst_36 = arith.constant 2.000000e-01 : f32
    %45 = vector.broadcast %cst_36 : f32 to vector<48x48xf32>
    %46 = arith.mulf %45, %42 : vector<48x48xf32>
    %47 = arith.select %44, %42, %46 : vector<48x48xi1>, vector<48x48xf32>
    %cst_37 = arith.constant -1.000000e+30 : f32
    %48 = vector.broadcast %cst_37 : f32 to vector<48x48xf32>
    %49 = arith.select %30, %47, %48 : vector<48x48xi1>, vector<48x48xf32>
    %cst_38 = arith.constant dense<0xFF800000> : vector<48xf32>
    %50 = vector.multi_reduction <maximumf>, %49, %cst_38 [1] : vector<48x48xf32> to vector<48xf32>
    %51 = vector.shape_cast %50 : vector<48xf32> to vector<48x1xf32>
    %52 = vector.broadcast %51 : vector<48x1xf32> to vector<48x48xf32>
    %53 = arith.subf %49, %52 : vector<48x48xf32>
    %54 = math.exp %53 : vector<48x48xf32>
    %cst_39 = arith.constant 0.000000e+00 : f32
    %55 = vector.broadcast %cst_39 : f32 to vector<48x48xf32>
    %c0_40 = arith.constant 0 : index
    %c0_41 = arith.constant 0 : index
    %c0_42 = arith.constant 0 : index
    %56 = vector.load %arg2[%c0_40, %c0_41, %c0_42] : memref<10x48x48xf32, #tpu.memory_space<vmem>>, vector<1x48x48xf32>
    %57 = vector.shape_cast %56 : vector<1x48x48xf32> to vector<48x48xf32>
    %58 = arith.mulf %54, %57 : vector<48x48xf32>
    %cst_43 = arith.constant dense<0.000000e+00> : vector<48xf32>
    %59 = vector.multi_reduction <add>, %58, %cst_43 [1] : vector<48x48xf32> to vector<48xf32>
    %60 = vector.shape_cast %59 : vector<48xf32> to vector<48x1xf32>
    %cst_44 = arith.constant 9.99999968E-21 : f32
    %61 = vector.broadcast %cst_44 : f32 to vector<48x1xf32>
    %62 = arith.maximumf %60, %61 : vector<48x1xf32>
    %63 = tpu.reciprocal %62 {approx = true} : vector<48x1xf32> -> vector<48x1xf32>
    %64 = vector.broadcast %63 : vector<48x1xf32> to vector<48x48xf32>
    %65 = arith.mulf %58, %64 : vector<48x48xf32>
    %66 = arith.addf %55, %65 : vector<48x48xf32>
    %c1_45 = arith.constant 1 : index
    %c0_46 = arith.constant 0 : index
    %c0_47 = arith.constant 0 : index
    %67 = vector.load %arg2[%c1_45, %c0_46, %c0_47] : memref<10x48x48xf32, #tpu.memory_space<vmem>>, vector<1x48x48xf32>
    %68 = vector.shape_cast %67 : vector<1x48x48xf32> to vector<48x48xf32>
    %69 = arith.mulf %54, %68 : vector<48x48xf32>
    %cst_48 = arith.constant dense<0.000000e+00> : vector<48xf32>
    %70 = vector.multi_reduction <add>, %69, %cst_48 [1] : vector<48x48xf32> to vector<48xf32>
    %71 = vector.shape_cast %70 : vector<48xf32> to vector<48x1xf32>
    %cst_49 = arith.constant 9.99999968E-21 : f32
    %72 = vector.broadcast %cst_49 : f32 to vector<48x1xf32>
    %73 = arith.maximumf %71, %72 : vector<48x1xf32>
    %74 = tpu.reciprocal %73 {approx = true} : vector<48x1xf32> -> vector<48x1xf32>
    %75 = vector.broadcast %74 : vector<48x1xf32> to vector<48x48xf32>
    %76 = arith.mulf %69, %75 : vector<48x48xf32>
    %77 = arith.addf %66, %76 : vector<48x48xf32>
    %c2_50 = arith.constant 2 : index
    %c0_51 = arith.constant 0 : index
    %c0_52 = arith.constant 0 : index
    %78 = vector.load %arg2[%c2_50, %c0_51, %c0_52] : memref<10x48x48xf32, #tpu.memory_space<vmem>>, vector<1x48x48xf32>
    %79 = vector.shape_cast %78 : vector<1x48x48xf32> to vector<48x48xf32>
    %80 = arith.mulf %54, %79 : vector<48x48xf32>
    %cst_53 = arith.constant dense<0.000000e+00> : vector<48xf32>
    %81 = vector.multi_reduction <add>, %80, %cst_53 [1] : vector<48x48xf32> to vector<48xf32>
    %82 = vector.shape_cast %81 : vector<48xf32> to vector<48x1xf32>
    %cst_54 = arith.constant 9.99999968E-21 : f32
    %83 = vector.broadcast %cst_54 : f32 to vector<48x1xf32>
    %84 = arith.maximumf %82, %83 : vector<48x1xf32>
    %85 = tpu.reciprocal %84 {approx = true} : vector<48x1xf32> -> vector<48x1xf32>
    %86 = vector.broadcast %85 : vector<48x1xf32> to vector<48x48xf32>
    %87 = arith.mulf %80, %86 : vector<48x48xf32>
    %88 = arith.addf %77, %87 : vector<48x48xf32>
    %c3_55 = arith.constant 3 : index
    %c0_56 = arith.constant 0 : index
    %c0_57 = arith.constant 0 : index
    %89 = vector.load %arg2[%c3_55, %c0_56, %c0_57] : memref<10x48x48xf32, #tpu.memory_space<vmem>>, vector<1x48x48xf32>
    %90 = vector.shape_cast %89 : vector<1x48x48xf32> to vector<48x48xf32>
    %91 = arith.mulf %54, %90 : vector<48x48xf32>
    %cst_58 = arith.constant dense<0.000000e+00> : vector<48xf32>
    %92 = vector.multi_reduction <add>, %91, %cst_58 [1] : vector<48x48xf32> to vector<48xf32>
    %93 = vector.shape_cast %92 : vector<48xf32> to vector<48x1xf32>
    %cst_59 = arith.constant 9.99999968E-21 : f32
    %94 = vector.broadcast %cst_59 : f32 to vector<48x1xf32>
    %95 = arith.maximumf %93, %94 : vector<48x1xf32>
    %96 = tpu.reciprocal %95 {approx = true} : vector<48x1xf32> -> vector<48x1xf32>
    %97 = vector.broadcast %96 : vector<48x1xf32> to vector<48x48xf32>
    %98 = arith.mulf %91, %97 : vector<48x48xf32>
    %99 = arith.addf %88, %98 : vector<48x48xf32>
    %c4_60 = arith.constant 4 : index
    %c0_61 = arith.constant 0 : index
    %c0_62 = arith.constant 0 : index
    %100 = vector.load %arg2[%c4_60, %c0_61, %c0_62] : memref<10x48x48xf32, #tpu.memory_space<vmem>>, vector<1x48x48xf32>
    %101 = vector.shape_cast %100 : vector<1x48x48xf32> to vector<48x48xf32>
    %102 = arith.mulf %54, %101 : vector<48x48xf32>
    %cst_63 = arith.constant dense<0.000000e+00> : vector<48xf32>
    %103 = vector.multi_reduction <add>, %102, %cst_63 [1] : vector<48x48xf32> to vector<48xf32>
    %104 = vector.shape_cast %103 : vector<48xf32> to vector<48x1xf32>
    %cst_64 = arith.constant 9.99999968E-21 : f32
    %105 = vector.broadcast %cst_64 : f32 to vector<48x1xf32>
    %106 = arith.maximumf %104, %105 : vector<48x1xf32>
    %107 = tpu.reciprocal %106 {approx = true} : vector<48x1xf32> -> vector<48x1xf32>
    %108 = vector.broadcast %107 : vector<48x1xf32> to vector<48x48xf32>
    %109 = arith.mulf %102, %108 : vector<48x48xf32>
    %110 = arith.addf %99, %109 : vector<48x48xf32>
    %c5_65 = arith.constant 5 : index
    %c0_66 = arith.constant 0 : index
    %c0_67 = arith.constant 0 : index
    %111 = vector.load %arg2[%c5_65, %c0_66, %c0_67] : memref<10x48x48xf32, #tpu.memory_space<vmem>>, vector<1x48x48xf32>
    %112 = vector.shape_cast %111 : vector<1x48x48xf32> to vector<48x48xf32>
    %113 = arith.mulf %54, %112 : vector<48x48xf32>
    %cst_68 = arith.constant dense<0.000000e+00> : vector<48xf32>
    %114 = vector.multi_reduction <add>, %113, %cst_68 [1] : vector<48x48xf32> to vector<48xf32>
    %115 = vector.shape_cast %114 : vector<48xf32> to vector<48x1xf32>
    %cst_69 = arith.constant 9.99999968E-21 : f32
    %116 = vector.broadcast %cst_69 : f32 to vector<48x1xf32>
    %117 = arith.maximumf %115, %116 : vector<48x1xf32>
    %118 = tpu.reciprocal %117 {approx = true} : vector<48x1xf32> -> vector<48x1xf32>
    %119 = vector.broadcast %118 : vector<48x1xf32> to vector<48x48xf32>
    %120 = arith.mulf %113, %119 : vector<48x48xf32>
    %121 = arith.addf %110, %120 : vector<48x48xf32>
    %c6_70 = arith.constant 6 : index
    %c0_71 = arith.constant 0 : index
    %c0_72 = arith.constant 0 : index
    %122 = vector.load %arg2[%c6_70, %c0_71, %c0_72] : memref<10x48x48xf32, #tpu.memory_space<vmem>>, vector<1x48x48xf32>
    %123 = vector.shape_cast %122 : vector<1x48x48xf32> to vector<48x48xf32>
    %124 = arith.mulf %54, %123 : vector<48x48xf32>
    %cst_73 = arith.constant dense<0.000000e+00> : vector<48xf32>
    %125 = vector.multi_reduction <add>, %124, %cst_73 [1] : vector<48x48xf32> to vector<48xf32>
    %126 = vector.shape_cast %125 : vector<48xf32> to vector<48x1xf32>
    %cst_74 = arith.constant 9.99999968E-21 : f32
    %127 = vector.broadcast %cst_74 : f32 to vector<48x1xf32>
    %128 = arith.maximumf %126, %127 : vector<48x1xf32>
    %129 = tpu.reciprocal %128 {approx = true} : vector<48x1xf32> -> vector<48x1xf32>
    %130 = vector.broadcast %129 : vector<48x1xf32> to vector<48x48xf32>
    %131 = arith.mulf %124, %130 : vector<48x48xf32>
    %132 = arith.addf %121, %131 : vector<48x48xf32>
    %c7_75 = arith.constant 7 : index
    %c0_76 = arith.constant 0 : index
    %c0_77 = arith.constant 0 : index
    %133 = vector.load %arg2[%c7_75, %c0_76, %c0_77] : memref<10x48x48xf32, #tpu.memory_space<vmem>>, vector<1x48x48xf32>
    %134 = vector.shape_cast %133 : vector<1x48x48xf32> to vector<48x48xf32>
    %135 = arith.mulf %54, %134 : vector<48x48xf32>
    %cst_78 = arith.constant dense<0.000000e+00> : vector<48xf32>
    %136 = vector.multi_reduction <add>, %135, %cst_78 [1] : vector<48x48xf32> to vector<48xf32>
    %137 = vector.shape_cast %136 : vector<48xf32> to vector<48x1xf32>
    %cst_79 = arith.constant 9.99999968E-21 : f32
    %138 = vector.broadcast %cst_79 : f32 to vector<48x1xf32>
    %139 = arith.maximumf %137, %138 : vector<48x1xf32>
    %140 = tpu.reciprocal %139 {approx = true} : vector<48x1xf32> -> vector<48x1xf32>
    %141 = vector.broadcast %140 : vector<48x1xf32> to vector<48x48xf32>
    %142 = arith.mulf %135, %141 : vector<48x48xf32>
    %143 = arith.addf %132, %142 : vector<48x48xf32>
    %c8_80 = arith.constant 8 : index
    %c0_81 = arith.constant 0 : index
    %c0_82 = arith.constant 0 : index
    %144 = vector.load %arg2[%c8_80, %c0_81, %c0_82] : memref<10x48x48xf32, #tpu.memory_space<vmem>>, vector<1x48x48xf32>
    %145 = vector.shape_cast %144 : vector<1x48x48xf32> to vector<48x48xf32>
    %146 = arith.mulf %54, %145 : vector<48x48xf32>
    %cst_83 = arith.constant dense<0.000000e+00> : vector<48xf32>
    %147 = vector.multi_reduction <add>, %146, %cst_83 [1] : vector<48x48xf32> to vector<48xf32>
    %148 = vector.shape_cast %147 : vector<48xf32> to vector<48x1xf32>
    %cst_84 = arith.constant 9.99999968E-21 : f32
    %149 = vector.broadcast %cst_84 : f32 to vector<48x1xf32>
    %150 = arith.maximumf %148, %149 : vector<48x1xf32>
    %151 = tpu.reciprocal %150 {approx = true} : vector<48x1xf32> -> vector<48x1xf32>
    %152 = vector.broadcast %151 : vector<48x1xf32> to vector<48x48xf32>
    %153 = arith.mulf %146, %152 : vector<48x48xf32>
    %154 = arith.addf %143, %153 : vector<48x48xf32>
    %c9_85 = arith.constant 9 : index
    %c0_86 = arith.constant 0 : index
    %c0_87 = arith.constant 0 : index
    %155 = vector.load %arg2[%c9_85, %c0_86, %c0_87] : memref<10x48x48xf32, #tpu.memory_space<vmem>>, vector<1x48x48xf32>
    %156 = vector.shape_cast %155 : vector<1x48x48xf32> to vector<48x48xf32>
    %157 = arith.mulf %54, %156 : vector<48x48xf32>
    %cst_88 = arith.constant dense<0.000000e+00> : vector<48xf32>
    %158 = vector.multi_reduction <add>, %157, %cst_88 [1] : vector<48x48xf32> to vector<48xf32>
    %159 = vector.shape_cast %158 : vector<48xf32> to vector<48x1xf32>
    %cst_89 = arith.constant 9.99999968E-21 : f32
    %160 = vector.broadcast %cst_89 : f32 to vector<48x1xf32>
    %161 = arith.maximumf %159, %160 : vector<48x1xf32>
    %162 = tpu.reciprocal %161 {approx = true} : vector<48x1xf32> -> vector<48x1xf32>
    %163 = vector.broadcast %162 : vector<48x1xf32> to vector<48x48xf32>
    %164 = arith.mulf %157, %163 : vector<48x48xf32>
    %165 = arith.addf %154, %164 : vector<48x48xf32>
    %cst_90 = arith.constant dense<0.000000e+00> : vector<48x128xf32>
    %166 = tpu.matmul %165, %37, %cst_90 {dimension_numbers = #tpu.dot_dimension_numbers<[1], [0], [0], [1], [0, 0, 1, 1], [], []>} : vector<48x48xf32>, vector<48x128xf32>, vector<48x128xf32> -> vector<48x128xf32>
    %167 = vector.broadcast %31 : vector<48x1xf32> to vector<48x128xf32>
    %168 = arith.mulf %166, %167 : vector<48x128xf32>
    %169 = vector.broadcast %36 : vector<1x128xf32> to vector<48x128xf32>
    %170 = arith.addf %168, %169 : vector<48x128xf32>
    %cst_91 = arith.constant 0.000000e+00 : f32
    %171 = vector.broadcast %cst_91 : f32 to vector<48x128xf32>
    %172 = arith.cmpf ogt, %170, %171 : vector<48x128xf32>
    %cst_92 = arith.constant 0.00999999977 : f32
    %173 = vector.broadcast %cst_92 : f32 to vector<48x128xf32>
    %174 = arith.mulf %173, %170 : vector<48x128xf32>
    %175 = arith.select %172, %170, %174 : vector<48x128xi1>, vector<48x128xf32>
    %c0_93 = arith.constant 0 : index
    %c0_94 = arith.constant 0 : index
    %176 = vector.load %arg9[%c0_93, %c0_94] : memref<128x128xf32, #tpu.memory_space<vmem>>, vector<128x128xf32>
    %c0_95 = arith.constant 0 : index
    %c0_96 = arith.constant 0 : index
    %177 = vector.load %arg10[%c0_95, %c0_96] : memref<1x128xf32, #tpu.memory_space<vmem>>, vector<1x128xf32>
    %c0_97 = arith.constant 0 : index
    %c0_98 = arith.constant 0 : index
    %178 = vector.load %arg11[%c0_97, %c0_98] : memref<1x128xf32, #tpu.memory_space<vmem>>, vector<1x128xf32>
    %c0_99 = arith.constant 0 : index
    %c0_100 = arith.constant 0 : index
    %179 = vector.load %arg12[%c0_99, %c0_100] : memref<1x128xf32, #tpu.memory_space<vmem>>, vector<1x128xf32>
    %cst_101 = arith.constant dense<0.000000e+00> : vector<48x128xf32>
    %180 = tpu.matmul %175, %176, %cst_101 {dimension_numbers = #tpu.dot_dimension_numbers<[1], [0], [0], [1], [0, 0, 1, 1], [], []>} : vector<48x128xf32>, vector<128x128xf32>, vector<48x128xf32> -> vector<48x128xf32>
    %cst_102 = arith.constant dense<0.000000e+00> : vector<48x1xf32>
    %181 = tpu.matmul %180, %178, %cst_102 {dimension_numbers = #tpu.dot_dimension_numbers<[1], [1], [0], [0], [0, 0, 1, 0], [], []>} : vector<48x128xf32>, vector<1x128xf32>, vector<48x1xf32> -> vector<48x1xf32>
    %cst_103 = arith.constant dense<0.000000e+00> : vector<1x48xf32>
    %182 = tpu.matmul %177, %180, %cst_103 {dimension_numbers = #tpu.dot_dimension_numbers<[1], [1], [0], [0], [0, 0, 1, 0], [], []>} : vector<1x128xf32>, vector<48x128xf32>, vector<1x48xf32> -> vector<1x48xf32>
    %183 = vector.broadcast %181 : vector<48x1xf32> to vector<48x48xf32>
    %184 = vector.broadcast %182 : vector<1x48xf32> to vector<48x48xf32>
    %185 = arith.addf %183, %184 : vector<48x48xf32>
    %cst_104 = arith.constant 0.000000e+00 : f32
    %186 = vector.broadcast %cst_104 : f32 to vector<48x48xf32>
    %187 = arith.cmpf ogt, %185, %186 : vector<48x48xf32>
    %cst_105 = arith.constant 2.000000e-01 : f32
    %188 = vector.broadcast %cst_105 : f32 to vector<48x48xf32>
    %189 = arith.mulf %188, %185 : vector<48x48xf32>
    %190 = arith.select %187, %185, %189 : vector<48x48xi1>, vector<48x48xf32>
    %cst_106 = arith.constant -1.000000e+30 : f32
    %191 = vector.broadcast %cst_106 : f32 to vector<48x48xf32>
    %192 = arith.select %30, %190, %191 : vector<48x48xi1>, vector<48x48xf32>
    %cst_107 = arith.constant dense<0xFF800000> : vector<48xf32>
    %193 = vector.multi_reduction <maximumf>, %192, %cst_107 [1] : vector<48x48xf32> to vector<48xf32>
    %194 = vector.shape_cast %193 : vector<48xf32> to vector<48x1xf32>
    %195 = vector.broadcast %194 : vector<48x1xf32> to vector<48x48xf32>
    %196 = arith.subf %192, %195 : vector<48x48xf32>
    %197 = math.exp %196 : vector<48x48xf32>
    %cst_108 = arith.constant 0.000000e+00 : f32
    %198 = vector.broadcast %cst_108 : f32 to vector<48x48xf32>
    %c0_109 = arith.constant 0 : index
    %c0_110 = arith.constant 0 : index
    %c0_111 = arith.constant 0 : index
    %199 = vector.load %arg2[%c0_109, %c0_110, %c0_111] : memref<10x48x48xf32, #tpu.memory_space<vmem>>, vector<1x48x48xf32>
    %200 = vector.shape_cast %199 : vector<1x48x48xf32> to vector<48x48xf32>
    %201 = arith.mulf %197, %200 : vector<48x48xf32>
    %cst_112 = arith.constant dense<0.000000e+00> : vector<48xf32>
    %202 = vector.multi_reduction <add>, %201, %cst_112 [1] : vector<48x48xf32> to vector<48xf32>
    %203 = vector.shape_cast %202 : vector<48xf32> to vector<48x1xf32>
    %cst_113 = arith.constant 9.99999968E-21 : f32
    %204 = vector.broadcast %cst_113 : f32 to vector<48x1xf32>
    %205 = arith.maximumf %203, %204 : vector<48x1xf32>
    %206 = tpu.reciprocal %205 {approx = true} : vector<48x1xf32> -> vector<48x1xf32>
    %207 = vector.broadcast %206 : vector<48x1xf32> to vector<48x48xf32>
    %208 = arith.mulf %201, %207 : vector<48x48xf32>
    %209 = arith.addf %198, %208 : vector<48x48xf32>
    %c1_114 = arith.constant 1 : index
    %c0_115 = arith.constant 0 : index
    %c0_116 = arith.constant 0 : index
    %210 = vector.load %arg2[%c1_114, %c0_115, %c0_116] : memref<10x48x48xf32, #tpu.memory_space<vmem>>, vector<1x48x48xf32>
    %211 = vector.shape_cast %210 : vector<1x48x48xf32> to vector<48x48xf32>
    %212 = arith.mulf %197, %211 : vector<48x48xf32>
    %cst_117 = arith.constant dense<0.000000e+00> : vector<48xf32>
    %213 = vector.multi_reduction <add>, %212, %cst_117 [1] : vector<48x48xf32> to vector<48xf32>
    %214 = vector.shape_cast %213 : vector<48xf32> to vector<48x1xf32>
    %cst_118 = arith.constant 9.99999968E-21 : f32
    %215 = vector.broadcast %cst_118 : f32 to vector<48x1xf32>
    %216 = arith.maximumf %214, %215 : vector<48x1xf32>
    %217 = tpu.reciprocal %216 {approx = true} : vector<48x1xf32> -> vector<48x1xf32>
    %218 = vector.broadcast %217 : vector<48x1xf32> to vector<48x48xf32>
    %219 = arith.mulf %212, %218 : vector<48x48xf32>
    %220 = arith.addf %209, %219 : vector<48x48xf32>
    %c2_119 = arith.constant 2 : index
    %c0_120 = arith.constant 0 : index
    %c0_121 = arith.constant 0 : index
    %221 = vector.load %arg2[%c2_119, %c0_120, %c0_121] : memref<10x48x48xf32, #tpu.memory_space<vmem>>, vector<1x48x48xf32>
    %222 = vector.shape_cast %221 : vector<1x48x48xf32> to vector<48x48xf32>
    %223 = arith.mulf %197, %222 : vector<48x48xf32>
    %cst_122 = arith.constant dense<0.000000e+00> : vector<48xf32>
    %224 = vector.multi_reduction <add>, %223, %cst_122 [1] : vector<48x48xf32> to vector<48xf32>
    %225 = vector.shape_cast %224 : vector<48xf32> to vector<48x1xf32>
    %cst_123 = arith.constant 9.99999968E-21 : f32
    %226 = vector.broadcast %cst_123 : f32 to vector<48x1xf32>
    %227 = arith.maximumf %225, %226 : vector<48x1xf32>
    %228 = tpu.reciprocal %227 {approx = true} : vector<48x1xf32> -> vector<48x1xf32>
    %229 = vector.broadcast %228 : vector<48x1xf32> to vector<48x48xf32>
    %230 = arith.mulf %223, %229 : vector<48x48xf32>
    %231 = arith.addf %220, %230 : vector<48x48xf32>
    %c3_124 = arith.constant 3 : index
    %c0_125 = arith.constant 0 : index
    %c0_126 = arith.constant 0 : index
    %232 = vector.load %arg2[%c3_124, %c0_125, %c0_126] : memref<10x48x48xf32, #tpu.memory_space<vmem>>, vector<1x48x48xf32>
    %233 = vector.shape_cast %232 : vector<1x48x48xf32> to vector<48x48xf32>
    %234 = arith.mulf %197, %233 : vector<48x48xf32>
    %cst_127 = arith.constant dense<0.000000e+00> : vector<48xf32>
    %235 = vector.multi_reduction <add>, %234, %cst_127 [1] : vector<48x48xf32> to vector<48xf32>
    %236 = vector.shape_cast %235 : vector<48xf32> to vector<48x1xf32>
    %cst_128 = arith.constant 9.99999968E-21 : f32
    %237 = vector.broadcast %cst_128 : f32 to vector<48x1xf32>
    %238 = arith.maximumf %236, %237 : vector<48x1xf32>
    %239 = tpu.reciprocal %238 {approx = true} : vector<48x1xf32> -> vector<48x1xf32>
    %240 = vector.broadcast %239 : vector<48x1xf32> to vector<48x48xf32>
    %241 = arith.mulf %234, %240 : vector<48x48xf32>
    %242 = arith.addf %231, %241 : vector<48x48xf32>
    %c4_129 = arith.constant 4 : index
    %c0_130 = arith.constant 0 : index
    %c0_131 = arith.constant 0 : index
    %243 = vector.load %arg2[%c4_129, %c0_130, %c0_131] : memref<10x48x48xf32, #tpu.memory_space<vmem>>, vector<1x48x48xf32>
    %244 = vector.shape_cast %243 : vector<1x48x48xf32> to vector<48x48xf32>
    %245 = arith.mulf %197, %244 : vector<48x48xf32>
    %cst_132 = arith.constant dense<0.000000e+00> : vector<48xf32>
    %246 = vector.multi_reduction <add>, %245, %cst_132 [1] : vector<48x48xf32> to vector<48xf32>
    %247 = vector.shape_cast %246 : vector<48xf32> to vector<48x1xf32>
    %cst_133 = arith.constant 9.99999968E-21 : f32
    %248 = vector.broadcast %cst_133 : f32 to vector<48x1xf32>
    %249 = arith.maximumf %247, %248 : vector<48x1xf32>
    %250 = tpu.reciprocal %249 {approx = true} : vector<48x1xf32> -> vector<48x1xf32>
    %251 = vector.broadcast %250 : vector<48x1xf32> to vector<48x48xf32>
    %252 = arith.mulf %245, %251 : vector<48x48xf32>
    %253 = arith.addf %242, %252 : vector<48x48xf32>
    %c5_134 = arith.constant 5 : index
    %c0_135 = arith.constant 0 : index
    %c0_136 = arith.constant 0 : index
    %254 = vector.load %arg2[%c5_134, %c0_135, %c0_136] : memref<10x48x48xf32, #tpu.memory_space<vmem>>, vector<1x48x48xf32>
    %255 = vector.shape_cast %254 : vector<1x48x48xf32> to vector<48x48xf32>
    %256 = arith.mulf %197, %255 : vector<48x48xf32>
    %cst_137 = arith.constant dense<0.000000e+00> : vector<48xf32>
    %257 = vector.multi_reduction <add>, %256, %cst_137 [1] : vector<48x48xf32> to vector<48xf32>
    %258 = vector.shape_cast %257 : vector<48xf32> to vector<48x1xf32>
    %cst_138 = arith.constant 9.99999968E-21 : f32
    %259 = vector.broadcast %cst_138 : f32 to vector<48x1xf32>
    %260 = arith.maximumf %258, %259 : vector<48x1xf32>
    %261 = tpu.reciprocal %260 {approx = true} : vector<48x1xf32> -> vector<48x1xf32>
    %262 = vector.broadcast %261 : vector<48x1xf32> to vector<48x48xf32>
    %263 = arith.mulf %256, %262 : vector<48x48xf32>
    %264 = arith.addf %253, %263 : vector<48x48xf32>
    %c6_139 = arith.constant 6 : index
    %c0_140 = arith.constant 0 : index
    %c0_141 = arith.constant 0 : index
    %265 = vector.load %arg2[%c6_139, %c0_140, %c0_141] : memref<10x48x48xf32, #tpu.memory_space<vmem>>, vector<1x48x48xf32>
    %266 = vector.shape_cast %265 : vector<1x48x48xf32> to vector<48x48xf32>
    %267 = arith.mulf %197, %266 : vector<48x48xf32>
    %cst_142 = arith.constant dense<0.000000e+00> : vector<48xf32>
    %268 = vector.multi_reduction <add>, %267, %cst_142 [1] : vector<48x48xf32> to vector<48xf32>
    %269 = vector.shape_cast %268 : vector<48xf32> to vector<48x1xf32>
    %cst_143 = arith.constant 9.99999968E-21 : f32
    %270 = vector.broadcast %cst_143 : f32 to vector<48x1xf32>
    %271 = arith.maximumf %269, %270 : vector<48x1xf32>
    %272 = tpu.reciprocal %271 {approx = true} : vector<48x1xf32> -> vector<48x1xf32>
    %273 = vector.broadcast %272 : vector<48x1xf32> to vector<48x48xf32>
    %274 = arith.mulf %267, %273 : vector<48x48xf32>
    %275 = arith.addf %264, %274 : vector<48x48xf32>
    %c7_144 = arith.constant 7 : index
    %c0_145 = arith.constant 0 : index
    %c0_146 = arith.constant 0 : index
    %276 = vector.load %arg2[%c7_144, %c0_145, %c0_146] : memref<10x48x48xf32, #tpu.memory_space<vmem>>, vector<1x48x48xf32>
    %277 = vector.shape_cast %276 : vector<1x48x48xf32> to vector<48x48xf32>
    %278 = arith.mulf %197, %277 : vector<48x48xf32>
    %cst_147 = arith.constant dense<0.000000e+00> : vector<48xf32>
    %279 = vector.multi_reduction <add>, %278, %cst_147 [1] : vector<48x48xf32> to vector<48xf32>
    %280 = vector.shape_cast %279 : vector<48xf32> to vector<48x1xf32>
    %cst_148 = arith.constant 9.99999968E-21 : f32
    %281 = vector.broadcast %cst_148 : f32 to vector<48x1xf32>
    %282 = arith.maximumf %280, %281 : vector<48x1xf32>
    %283 = tpu.reciprocal %282 {approx = true} : vector<48x1xf32> -> vector<48x1xf32>
    %284 = vector.broadcast %283 : vector<48x1xf32> to vector<48x48xf32>
    %285 = arith.mulf %278, %284 : vector<48x48xf32>
    %286 = arith.addf %275, %285 : vector<48x48xf32>
    %c8_149 = arith.constant 8 : index
    %c0_150 = arith.constant 0 : index
    %c0_151 = arith.constant 0 : index
    %287 = vector.load %arg2[%c8_149, %c0_150, %c0_151] : memref<10x48x48xf32, #tpu.memory_space<vmem>>, vector<1x48x48xf32>
    %288 = vector.shape_cast %287 : vector<1x48x48xf32> to vector<48x48xf32>
    %289 = arith.mulf %197, %288 : vector<48x48xf32>
    %cst_152 = arith.constant dense<0.000000e+00> : vector<48xf32>
    %290 = vector.multi_reduction <add>, %289, %cst_152 [1] : vector<48x48xf32> to vector<48xf32>
    %291 = vector.shape_cast %290 : vector<48xf32> to vector<48x1xf32>
    %cst_153 = arith.constant 9.99999968E-21 : f32
    %292 = vector.broadcast %cst_153 : f32 to vector<48x1xf32>
    %293 = arith.maximumf %291, %292 : vector<48x1xf32>
    %294 = tpu.reciprocal %293 {approx = true} : vector<48x1xf32> -> vector<48x1xf32>
    %295 = vector.broadcast %294 : vector<48x1xf32> to vector<48x48xf32>
    %296 = arith.mulf %289, %295 : vector<48x48xf32>
    %297 = arith.addf %286, %296 : vector<48x48xf32>
    %c9_154 = arith.constant 9 : index
    %c0_155 = arith.constant 0 : index
    %c0_156 = arith.constant 0 : index
    %298 = vector.load %arg2[%c9_154, %c0_155, %c0_156] : memref<10x48x48xf32, #tpu.memory_space<vmem>>, vector<1x48x48xf32>
    %299 = vector.shape_cast %298 : vector<1x48x48xf32> to vector<48x48xf32>
    %300 = arith.mulf %197, %299 : vector<48x48xf32>
    %cst_157 = arith.constant dense<0.000000e+00> : vector<48xf32>
    %301 = vector.multi_reduction <add>, %300, %cst_157 [1] : vector<48x48xf32> to vector<48xf32>
    %302 = vector.shape_cast %301 : vector<48xf32> to vector<48x1xf32>
    %cst_158 = arith.constant 9.99999968E-21 : f32
    %303 = vector.broadcast %cst_158 : f32 to vector<48x1xf32>
    %304 = arith.maximumf %302, %303 : vector<48x1xf32>
    %305 = tpu.reciprocal %304 {approx = true} : vector<48x1xf32> -> vector<48x1xf32>
    %306 = vector.broadcast %305 : vector<48x1xf32> to vector<48x48xf32>
    %307 = arith.mulf %300, %306 : vector<48x48xf32>
    %308 = arith.addf %297, %307 : vector<48x48xf32>
    %cst_159 = arith.constant dense<0.000000e+00> : vector<48x128xf32>
    %309 = tpu.matmul %308, %180, %cst_159 {dimension_numbers = #tpu.dot_dimension_numbers<[1], [0], [0], [1], [0, 0, 1, 1], [], []>} : vector<48x48xf32>, vector<48x128xf32>, vector<48x128xf32> -> vector<48x128xf32>
    %310 = vector.broadcast %31 : vector<48x1xf32> to vector<48x128xf32>
    %311 = arith.mulf %309, %310 : vector<48x128xf32>
    %312 = vector.broadcast %179 : vector<1x128xf32> to vector<48x128xf32>
    %313 = arith.addf %311, %312 : vector<48x128xf32>
    %cst_160 = arith.constant 0.000000e+00 : f32
    %314 = vector.broadcast %cst_160 : f32 to vector<48x128xf32>
    %315 = arith.cmpf ogt, %313, %314 : vector<48x128xf32>
    %cst_161 = arith.constant 0.00999999977 : f32
    %316 = vector.broadcast %cst_161 : f32 to vector<48x128xf32>
    %317 = arith.mulf %316, %313 : vector<48x128xf32>
    %318 = arith.select %315, %313, %317 : vector<48x128xi1>, vector<48x128xf32>
    %c0_162 = arith.constant 0 : index
    %c0_163 = arith.constant 0 : index
    %319 = vector.load %arg4[%c0_162, %c0_163] : memref<2x48xf32, #tpu.memory_space<vmem>>, vector<2x48xf32>
    %cst_164 = arith.constant dense<0.000000e+00> : vector<2x128xf32>
    %320 = tpu.matmul %319, %318, %cst_164 {dimension_numbers = #tpu.dot_dimension_numbers<[1], [0], [0], [1], [0, 0, 1, 1], [], []>} : vector<2x48xf32>, vector<48x128xf32>, vector<2x128xf32> -> vector<2x128xf32>
    %c0_165 = arith.constant 0 : index
    %c0_166 = arith.constant 0 : index
    %321 = vector.load %arg13[%c0_165, %c0_166] : memref<128x64xf32, #tpu.memory_space<vmem>>, vector<128x64xf32>
    %cst_167 = arith.constant dense<0.000000e+00> : vector<2x64xf32>
    %322 = tpu.matmul %320, %321, %cst_167 {dimension_numbers = #tpu.dot_dimension_numbers<[1], [0], [0], [1], [0, 0, 1, 1], [], []>} : vector<2x128xf32>, vector<128x64xf32>, vector<2x64xf32> -> vector<2x64xf32>
    %c0_168 = arith.constant 0 : index
    %c0_169 = arith.constant 0 : index
    %323 = vector.load %arg14[%c0_168, %c0_169] : memref<1x64xf32, #tpu.memory_space<vmem>>, vector<1x64xf32>
    %324 = vector.broadcast %323 : vector<1x64xf32> to vector<2x64xf32>
    %325 = arith.addf %322, %324 : vector<2x64xf32>
    %cst_170 = arith.constant 0.000000e+00 : f32
    %326 = vector.broadcast %cst_170 : f32 to vector<2x64xf32>
    %327 = arith.cmpf ogt, %325, %326 : vector<2x64xf32>
    %cst_171 = arith.constant 0.00999999977 : f32
    %328 = vector.broadcast %cst_171 : f32 to vector<2x64xf32>
    %329 = arith.mulf %328, %325 : vector<2x64xf32>
    %330 = arith.select %327, %325, %329 : vector<2x64xi1>, vector<2x64xf32>
    %c0_172 = arith.constant 0 : index
    %c0_173 = arith.constant 0 : index
    %331 = vector.load %arg15[%c0_172, %c0_173] : memref<64x128xf32, #tpu.memory_space<vmem>>, vector<64x128xf32>
    %cst_174 = arith.constant dense<0.000000e+00> : vector<2x128xf32>
    %332 = tpu.matmul %330, %331, %cst_174 {dimension_numbers = #tpu.dot_dimension_numbers<[1], [0], [0], [1], [0, 0, 1, 1], [], []>} : vector<2x64xf32>, vector<64x128xf32>, vector<2x128xf32> -> vector<2x128xf32>
    %c0_175 = arith.constant 0 : index
    %c0_176 = arith.constant 0 : index
    %333 = vector.load %arg16[%c0_175, %c0_176] : memref<1x128xf32, #tpu.memory_space<vmem>>, vector<1x128xf32>
    %334 = vector.broadcast %333 : vector<1x128xf32> to vector<2x128xf32>
    %335 = arith.addf %332, %334 : vector<2x128xf32>
    %cst_177 = arith.constant 0.000000e+00 : f32
    %336 = vector.broadcast %cst_177 : f32 to vector<2x128xf32>
    %337 = arith.cmpf ogt, %335, %336 : vector<2x128xf32>
    %cst_178 = arith.constant 0.00999999977 : f32
    %338 = vector.broadcast %cst_178 : f32 to vector<2x128xf32>
    %339 = arith.mulf %338, %335 : vector<2x128xf32>
    %340 = arith.select %337, %335, %339 : vector<2x128xi1>, vector<2x128xf32>
    %341 = arith.addf %340, %320 : vector<2x128xf32>
    %c0_179 = arith.constant 0 : index
    %c0_180 = arith.constant 0 : index
    %342 = vector.load %arg17[%c0_179, %c0_180] : memref<128x384xf32, #tpu.memory_space<vmem>>, vector<128x384xf32>
    %cst_181 = arith.constant dense<0.000000e+00> : vector<2x384xf32>
    %343 = tpu.matmul %341, %342, %cst_181 {dimension_numbers = #tpu.dot_dimension_numbers<[1], [0], [0], [1], [0, 0, 1, 1], [], []>} : vector<2x128xf32>, vector<128x384xf32>, vector<2x384xf32> -> vector<2x384xf32>
    %c0_182 = arith.constant 0 : index
    %c0_183 = arith.constant 0 : index
    %344 = vector.load %arg18[%c0_182, %c0_183] : memref<1x384xf32, #tpu.memory_space<vmem>>, vector<1x384xf32>
    %345 = vector.broadcast %344 : vector<1x384xf32> to vector<2x384xf32>
    %346 = arith.addf %343, %345 : vector<2x384xf32>
    %c0_184 = arith.constant 0 : index
    %c0_185 = arith.constant 0 : index
    %347 = vector.load %arg19[%c0_184, %c0_185] : memref<2x384xf32, #tpu.memory_space<vmem>>, vector<2x384xf32>
    tpu.vector_store %arg19[%c0_184, %c0_185], %346 {strides = array<i32>} : memref<2x384xf32, #tpu.memory_space<vmem>>, vector<2x384xf32>,
    return
  }
  func.func @transform_0(%arg0: i32) -> (i32, i32) {
    %c0_i32 = arith.constant 0 : i32
    %c0_i32_0 = arith.constant 0 : i32
    %c0_i32_1 = arith.constant 0 : i32
    return %c0_i32, %c0_i32_0 : i32, i32
  }
  func.func @transform_1(%arg0: i32) -> (i32, i32, i32) {
    %c0_i32 = arith.constant 0 : i32
    %c0_i32_0 = arith.constant 0 : i32
    %c0_i32_1 = arith.constant 0 : i32
    %c0_i32_2 = arith.constant 0 : i32
    return %c0_i32, %c0_i32_0, %c0_i32_1 : i32, i32, i32
  }
  func.func @transform_2(%arg0: i32) -> (i32, i32) {
    %c0_i32 = arith.constant 0 : i32
    %c0_i32_0 = arith.constant 0 : i32
    %c0_i32_1 = arith.constant 0 : i32
    return %c0_i32, %c0_i32_0 : i32, i32
  }
  func.func @transform_3(%arg0: i32) -> (i32, i32) {
    %c0_i32 = arith.constant 0 : i32
    %c0_i32_0 = arith.constant 0 : i32
    %c0_i32_1 = arith.constant 0 : i32
    return %c0_i32, %c0_i32_0 : i32, i32
  }
  func.func @transform_4(%arg0: i32) -> (i32, i32) {
    %c0_i32 = arith.constant 0 : i32
    %c0_i32_0 = arith.constant 0 : i32
    %c0_i32_1 = arith.constant 0 : i32
    return %c0_i32, %c0_i32_0 : i32, i32
  }
  func.func @transform_5(%arg0: i32) -> (i32, i32) {
    %c0_i32 = arith.constant 0 : i32
    %c0_i32_0 = arith.constant 0 : i32
    %c0_i32_1 = arith.constant 0 : i32
    return %c0_i32, %c0_i32_0 : i32, i32
  }
  func.func @transform_6(%arg0: i32) -> (i32, i32) {
    %c0_i32 = arith.constant 0 : i32
    %c0_i32_0 = arith.constant 0 : i32
    %c0_i32_1 = arith.constant 0 : i32
    return %c0_i32, %c0_i32_0 : i32, i32
  }
  func.func @transform_7(%arg0: i32) -> (i32, i32) {
    %c0_i32 = arith.constant 0 : i32
    %c0_i32_0 = arith.constant 0 : i32
    %c0_i32_1 = arith.constant 0 : i32
    return %c0_i32, %c0_i32_0 : i32, i32
  }
  func.func @transform_8(%arg0: i32) -> (i32, i32) {
    %c0_i32 = arith.constant 0 : i32
    %c0_i32_0 = arith.constant 0 : i32
    %c0_i32_1 = arith.constant 0 : i32
    return %c0_i32, %c0_i32_0 : i32, i32
  }
  func.func @transform_9(%arg0: i32) -> (i32, i32) {
    %c0_i32 = arith.constant 0 : i32
    %c0_i32_0 = arith.constant 0 : i32
    %c0_i32_1 = arith.constant 0 : i32
    return %c0_i32, %c0_i32_0 : i32, i32
  }
  func.func @transform_10(%arg0: i32) -> (i32, i32) {
    %c0_i32 = arith.constant 0 : i32
    %c0_i32_0 = arith.constant 0 : i32
    %c0_i32_1 = arith.constant 0 : i32
    return %c0_i32, %c0_i32_0 : i32, i32
  }
  func.func @transform_11(%arg0: i32) -> (i32, i32) {
    %c0_i32 = arith.constant 0 : i32
    %c0_i32_0 = arith.constant 0 : i32
    %c0_i32_1 = arith.constant 0 : i32
    return %c0_i32, %c0_i32_0 : i32, i32
  }
  func.func @transform_12(%arg0: i32) -> (i32, i32) {
    %c0_i32 = arith.constant 0 : i32
    %c0_i32_0 = arith.constant 0 : i32
    %c0_i32_1 = arith.constant 0 : i32
    return %c0_i32, %c0_i32_0 : i32, i32
  }
  func.func @transform_13(%arg0: i32) -> (i32, i32) {
    %c0_i32 = arith.constant 0 : i32
    %c0_i32_0 = arith.constant 0 : i32
    %c0_i32_1 = arith.constant 0 : i32
    return %c0_i32, %c0_i32_0 : i32, i32
  }
  func.func @transform_14(%arg0: i32) -> (i32, i32) {
    %c0_i32 = arith.constant 0 : i32
    %c0_i32_0 = arith.constant 0 : i32
    %c0_i32_1 = arith.constant 0 : i32
    return %c0_i32, %c0_i32_0 : i32, i32
  }
  func.func @transform_15(%arg0: i32) -> (i32, i32) {
    %c0_i32 = arith.constant 0 : i32
    %c0_i32_0 = arith.constant 0 : i32
    %c0_i32_1 = arith.constant 0 : i32
    return %c0_i32, %c0_i32_0 : i32, i32
  }
  func.func @transform_16(%arg0: i32) -> (i32, i32) {
    %c0_i32 = arith.constant 0 : i32
    %c0_i32_0 = arith.constant 0 : i32
    %c0_i32_1 = arith.constant 0 : i32
    return %c0_i32, %c0_i32_0 : i32, i32
  }
  func.func @transform_17(%arg0: i32) -> (i32, i32) {
    %c0_i32 = arith.constant 0 : i32
    %c0_i32_0 = arith.constant 0 : i32
    %c0_i32_1 = arith.constant 0 : i32
    return %c0_i32, %c0_i32_0 : i32, i32
  }
  func.func @transform_18(%arg0: i32) -> (i32, i32) {
    %c0_i32 = arith.constant 0 : i32
    %c0_i32_0 = arith.constant 0 : i32
    %c0_i32_1 = arith.constant 0 : i32
    return %c0_i32, %c0_i32_0 : i32, i32
  }
}

</mosaic_0001>

<llo_original>
// kernel: tpu_custom_call.1
$region0: #{tpu_custom_call.1}
  #allocation0 [shape = 'u32[]', space=smem, size = 0x4, offset = 0x4, fixed_abs, tag = 'smem constant byte address 0x4 - core index']
  #allocation1 [shape = 'u32[72,128]{1,0:T(1,128)}', space=vmem, size = 0x9000, scoped, tag = 'internal scratch']
  %s0 = inlined_call_operand.vmem [shape: f32[48,16], index: 0, kind: input, shape index: {}]
  %s1 = inlined_call_operand.hbm [shape: f32[10,48,48], index: 1, kind: input, shape index: {}]
  %s2 = inlined_call_operand.vmem [shape: f32[48,1], index: 2, kind: input, shape index: {}]
  %s3 = inlined_call_operand.vmem [shape: f32[2,48], index: 3, kind: input, shape index: {}]
  %s4 = inlined_call_operand.vmem [shape: f32[16,128], index: 4, kind: input, shape index: {}]
  %s5 = inlined_call_operand.vmem [shape: f32[1,128], index: 5, kind: input, shape index: {}]
  %s6 = inlined_call_operand.vmem [shape: f32[1,128], index: 6, kind: input, shape index: {}]
  %s7 = inlined_call_operand.vmem [shape: f32[1,128], index: 7, kind: input, shape index: {}]
  %s8 = inlined_call_operand.vmem [shape: f32[128,128], index: 8, kind: input, shape index: {}]
  %s9 = inlined_call_operand.vmem [shape: f32[1,128], index: 9, kind: input, shape index: {}]
  %s10 = inlined_call_operand.vmem [shape: f32[1,128], index: 10, kind: input, shape index: {}]
  %s11 = inlined_call_operand.vmem [shape: f32[1,128], index: 11, kind: input, shape index: {}]
  %s12 = inlined_call_operand.vmem [shape: f32[128,64], index: 12, kind: input, shape index: {}]
  %s13 = inlined_call_operand.vmem [shape: f32[1,64], index: 13, kind: input, shape index: {}]
  %s14 = inlined_call_operand.vmem [shape: f32[64,128], index: 14, kind: input, shape index: {}]
  %s15 = inlined_call_operand.vmem [shape: f32[1,128], index: 15, kind: input, shape index: {}]
  %s16 = inlined_call_operand.hbm [shape: f32[128,384], index: 16, kind: input, shape index: {}]
  %s17 = inlined_call_operand.vmem [shape: f32[1,384], index: 17, kind: input, shape index: {}]
  %s18 = inlined_call_operand.hbm [shape: f32[2,384], index: 18, kind: output, shape index: {}]
  %s19 = sld [smem:[#allocation0]]
  $region90: #{tpu_custom_call.1} parent=0
    _
  %s21 = ssub.s32 1, %s19
  %s22 = scalar_select 0, %s21, %s19
  $region1: #{tpu_custom_call.1} parent=0
    #allocation2 [shape = 'u8[245760]{0}', space=vmem, size = 0x3c000, scoped, tag = 'input window, operand 1, single buffered']
    #allocation3 [shape = 's32[1]{0}', space=sflag, size = 0x4, scoped, tag = 'scoped memory for tpu_custom_call.1']
    #allocation4 [shape = 's32[1]{0}', space=sflag, size = 0x4, scoped, tag = 'scoped memory for tpu_custom_call.1']
    #allocation5 [shape = 'u8[196608]{0}', space=vmem, size = 0x30000, scoped, tag = 'input window, operand 16, single buffered']
    #allocation6 [shape = 's32[1]{0}', space=sflag, size = 0x4, scoped, tag = 'scoped memory for tpu_custom_call.1']
    #allocation7 [shape = 'u8[3072]{0}', space=vmem, size = 0xc00, scoped, tag = 'output window, operand 0, single buffered']
    %23 = vsyncpa [#allocation3], 0
    %24 = vsyncpa [#allocation6], 0
    %25 = vsyncpa [#allocation4], 0
    // Predicated region
    $region2: #{tpu_custom_call.1} parent=1 // pred_check
      _
    $region3: #{tpu_custom_call.1} parent=1 // pred_check_branch
      %27 = sbr.rel (0) target = $region5
    $region4: #{tpu_custom_call.1} parent=1 // pred_region
      _
    $region5: #{tpu_custom_call.1} parent=1 // pred_fallthru
      _
    // Predicated region
    $region6: #{tpu_custom_call.1} parent=1 // pred_check
      _
    $region7: #{tpu_custom_call.1} parent=1 // pred_check_branch
      %29 = sbr.rel (0) target = $region9
    $region8: #{tpu_custom_call.1} parent=1 // pred_region
      %31 = vsyncadd [#allocation3], 0
      %s32 = sshll.u32 %s1, 4
      %s33 = int_to_ptr.hbm [resolvable:$true] %s32
      %s34 = sshll.u32 [#allocation2], 4
      %s35 = int_to_ptr.vmem [resolvable:$true] %s34
      %40 = dma.hbm_to_vmem [thread:$0]  %s33, 7680, %s35, [#allocation3], 128, 128, 8
    $region9: #{tpu_custom_call.1} parent=1 // pred_fallthru
      _
    // Predicated region
    $region10: #{tpu_custom_call.1} parent=1 // pred_check
      _
    $region11: #{tpu_custom_call.1} parent=1 // pred_check_branch
      %42 = sbr.rel (0) target = $region13
    $region12: #{tpu_custom_call.1} parent=1 // pred_region
      _
    $region13: #{tpu_custom_call.1} parent=1 // pred_fallthru
      _
    // Predicated region
    $region14: #{tpu_custom_call.1} parent=1 // pred_check
      _
    $region15: #{tpu_custom_call.1} parent=1 // pred_check_branch
      %44 = sbr.rel (0) target = $region17
    $region16: #{tpu_custom_call.1} parent=1 // pred_region
      _
    $region17: #{tpu_custom_call.1} parent=1 // pred_fallthru
      _
    // Predicated region
    $region18: #{tpu_custom_call.1} parent=1 // pred_check
      _
    $region19: #{tpu_custom_call.1} parent=1 // pred_check_branch
      %46 = sbr.rel (0) target = $region21
    $region20: #{tpu_custom_call.1} parent=1 // pred_region
      _
    $region21: #{tpu_custom_call.1} parent=1 // pred_fallthru
      _
    // Predicated region
    $region22: #{tpu_custom_call.1} parent=1 // pred_check
      _
    $region23: #{tpu_custom_call.1} parent=1 // pred_check_branch
      %48 = sbr.rel (0) target = $region25
    $region24: #{tpu_custom_call.1} parent=1 // pred_region
      _
    $region25: #{tpu_custom_call.1} parent=1 // pred_fallthru
      _
    // Predicated region
    $region26: #{tpu_custom_call.1} parent=1 // pred_check
      _
    $region27: #{tpu_custom_call.1} parent=1 // pred_check_branch
      %50 = sbr.rel (0) target = $region29
    $region28: #{tpu_custom_call.1} parent=1 // pred_region
      _
    $region29: #{tpu_custom_call.1} parent=1 // pred_fallthru
      _
    // Predicated region
    $region30: #{tpu_custom_call.1} parent=1 // pred_check
      _
    $region31: #{tpu_custom_call.1} parent=1 // pred_check_branch
      %52 = sbr.rel (0) target = $region33
    $region32: #{tpu_custom_call.1} parent=1 // pred_region
      _
    $region33: #{tpu_custom_call.1} parent=1 // pred_fallthru
      _
    // Predicated region
    $region34: #{tpu_custom_call.1} parent=1 // pred_check
      _
    $region35: #{tpu_custom_call.1} parent=1 // pred_check_branch
      %54 = sbr.rel (0) target = $region37
    $region36: #{tpu_custom_call.1} parent=1 // pred_region
      _
    $region37: #{tpu_custom_call.1} parent=1 // pred_fallthru
      _
    // Predicated region
    $region38: #{tpu_custom_call.1} parent=1 // pred_check
      _
    $region39: #{tpu_custom_call.1} parent=1 // pred_check_branch
      %56 = sbr.rel (0) target = $region41
    $region40: #{tpu_custom_call.1} parent=1 // pred_region
      _
    $region41: #{tpu_custom_call.1} parent=1 // pred_fallthru
      _
    // Predicated region
    $region42: #{tpu_custom_call.1} parent=1 // pred_check
      _
    $region43: #{tpu_custom_call.1} parent=1 // pred_check_branch
      %58 = sbr.rel (0) target = $region45
    $region44: #{tpu_custom_call.1} parent=1 // pred_region
      _
    $region45: #{tpu_custom_call.1} parent=1 // pred_fallthru
      _
    // Predicated region
    $region46: #{tpu_custom_call.1} parent=1 // pred_check
      _
    $region47: #{tpu_custom_call.1} parent=1 // pred_check_branch
      %60 = sbr.rel (0) target = $region49
    $region48: #{tpu_custom_call.1} parent=1 // pred_region
      _
    $region49: #{tpu_custom_call.1} parent=1 // pred_fallthru
      _
    // Predicated region
    $region50: #{tpu_custom_call.1} parent=1 // pred_check
      _
    $region51: #{tpu_custom_call.1} parent=1 // pred_check_branch
      %62 = sbr.rel (0) target = $region53
    $region52: #{tpu_custom_call.1} parent=1 // pred_region
      _
    $region53: #{tpu_custom_call.1} parent=1 // pred_fallthru
      _
    // Predicated region
    $region54: #{tpu_custom_call.1} parent=1 // pred_check
      _
    $region55: #{tpu_custom_call.1} parent=1 // pred_check_branch
      %64 = sbr.rel (0) target = $region57
    $region56: #{tpu_custom_call.1} parent=1 // pred_region
      _
    $region57: #{tpu_custom_call.1} parent=1 // pred_fallthru
      _
    // Predicated region
    $region58: #{tpu_custom_call.1} parent=1 // pred_check
      _
    $region59: #{tpu_custom_call.1} parent=1 // pred_check_branch
      %66 = sbr.rel (0) target = $region61
    $region60: #{tpu_custom_call.1} parent=1 // pred_region
      _
    $region61: #{tpu_custom_call.1} parent=1 // pred_fallthru
      _
    // Predicated region
    $region62: #{tpu_custom_call.1} parent=1 // pred_check
      _
    $region63: #{tpu_custom_call.1} parent=1 // pred_check_branch
      %68 = sbr.rel (0) target = $region65
    $region64: #{tpu_custom_call.1} parent=1 // pred_region
      _
    $region65: #{tpu_custom_call.1} parent=1 // pred_fallthru
      _
    // Predicated region
    $region66: #{tpu_custom_call.1} parent=1 // pred_check
      _
    $region67: #{tpu_custom_call.1} parent=1 // pred_check_branch
      %70 = sbr.rel (0) target = $region69
    $region68: #{tpu_custom_call.1} parent=1 // pred_region
      %72 = vsyncadd [#allocation6], 0
      %s73 = sshll.u32 %s16, 4
      %s74 = int_to_ptr.hbm [resolvable:$true] %s73
      %s75 = sshll.u32 [#allocation5], 4
      %s76 = int_to_ptr.vmem [resolvable:$true] %s75
      %81 = dma.hbm_to_vmem [thread:$0]  %s74, 6144, %s76, [#allocation6], 384, 384, 24
    $region69: #{tpu_custom_call.1} parent=1 // pred_fallthru
      _
    // Predicated region
    $region70: #{tpu_custom_call.1} parent=1 // pred_check
      _
    $region71: #{tpu_custom_call.1} parent=1 // pred_check_branch
      %83 = sbr.rel (0) target = $region73
    $region72: #{tpu_custom_call.1} parent=1 // pred_region
      _
    $region73: #{tpu_custom_call.1} parent=1 // pred_fallthru
      _
    // Predicated region
    $region74: #{tpu_custom_call.1} parent=1 // pred_check
      _
    $region75: #{tpu_custom_call.1} parent=1 // pred_check_branch
      %85 = sbr.rel (0) target = $region77
    $region76: #{tpu_custom_call.1} parent=1 // pred_region
      %87 = dma.done [#allocation3], 7680
    $region77: #{tpu_custom_call.1} parent=1 // pred_fallthru
      _
    // Predicated region
    $region78: #{tpu_custom_call.1} parent=1 // pred_check
      _
    $region79: #{tpu_custom_call.1} parent=1 // pred_check_branch
      %89 = sbr.rel (0) target = $region81
    $region80: #{tpu_custom_call.1} parent=1 // pred_region
      %91 = dma.done [#allocation6], 6144
    $region81: #{tpu_custom_call.1} parent=1 // pred_fallthru
      _
    %v92 = vld [vmem:[#allocation2] sm:$0xff]
    %v93 = vld [vmem:[#allocation2 + $0x8] sm:$0xff]
    %v94 = vld [vmem:[#allocation2 + $0x10] sm:$0xff]
    %v95 = vld [vmem:[#allocation2 + $0x18] sm:$0xff]
    %v96 = vld [vmem:[#allocation2 + $0x20] sm:$0xff]
    %v97 = vld [vmem:[#allocation2 + $0x28] sm:$0xff]
    %s98 = scalar_lea.vmem [#allocation2], 48
    %v99 = vld [vmem:[%s98] sm:$0xff]
    %v100 = vld [vmem:[%s98 + $0x8] sm:$0xff]
    %v101 = vld [vmem:[%s98 + $0x10] sm:$0xff]
    %v102 = vld [vmem:[%s98 + $0x18] sm:$0xff]
    %v103 = vld [vmem:[%s98 + $0x20] sm:$0xff]
    %v104 = vld [vmem:[%s98 + $0x28] sm:$0xff]
    %v105 = vadd.f32 %v92, %v99
    %v106 = vadd.f32 %v93, %v100
    %v107 = vadd.f32 %v94, %v101
    %v108 = vadd.f32 %v95, %v102
    %v109 = vadd.f32 %v96, %v103
    %v110 = vadd.f32 %v97, %v104
    %s111 = scalar_lea.vmem [#allocation2], 96
    %v112 = vld [vmem:[%s111] sm:$0xff]
    %v113 = vld [vmem:[%s111 + $0x8] sm:$0xff]
    %v114 = vld [vmem:[%s111 + $0x10] sm:$0xff]
    %v115 = vld [vmem:[%s111 + $0x18] sm:$0xff]
    %v116 = vld [vmem:[%s111 + $0x20] sm:$0xff]
    %v117 = vld [vmem:[%s111 + $0x28] sm:$0xff]
    %v118 = vadd.f32 %v105, %v112
    %v119 = vadd.f32 %v106, %v113
    %v120 = vadd.f32 %v107, %v114
    %v121 = vadd.f32 %v108, %v115
    %v122 = vadd.f32 %v109, %v116
    %v123 = vadd.f32 %v110, %v117
    %s124 = scalar_lea.vmem [#allocation2], 144
    %v125 = vld [vmem:[%s124] sm:$0xff]
    %v126 = vld [vmem:[%s124 + $0x8] sm:$0xff]
    %v127 = vld [vmem:[%s124 + $0x10] sm:$0xff]
    %v128 = vld [vmem:[%s124 + $0x18] sm:$0xff]
    %v129 = vld [vmem:[%s124 + $0x20] sm:$0xff]
    %v130 = vld [vmem:[%s124 + $0x28] sm:$0xff]
    %v131 = vadd.f32 %v118, %v125
    %v132 = vadd.f32 %v119, %v126
    %v133 = vadd.f32 %v120, %v127
    %v134 = vadd.f32 %v121, %v128
    %v135 = vadd.f32 %v122, %v129
    %v136 = vadd.f32 %v123, %v130
    %s137 = scalar_lea.vmem [#allocation2], 192
    %v138 = vld [vmem:[%s137] sm:$0xff]
    %v139 = vld [vmem:[%s137 + $0x8] sm:$0xff]
    %v140 = vld [vmem:[%s137 + $0x10] sm:$0xff]
    %v141 = vld [vmem:[%s137 + $0x18] sm:$0xff]
    %v142 = vld [vmem:[%s137 + $0x20] sm:$0xff]
    %v143 = vld [vmem:[%s137 + $0x28] sm:$0xff]
    %v144 = vadd.f32 %v131, %v138
    %v145 = vadd.f32 %v132, %v139
    %v146 = vadd.f32 %v133, %v140
    %v147 = vadd.f32 %v134, %v141
    %v148 = vadd.f32 %v135, %v142
    %v149 = vadd.f32 %v136, %v143
    %s150 = scalar_lea.vmem [#allocation2], 240
    %v151 = vld [vmem:[%s150] sm:$0xff]
    %v152 = vld [vmem:[%s150 + $0x8] sm:$0xff]
    %v153 = vld [vmem:[%s150 + $0x10] sm:$0xff]
    %v154 = vld [vmem:[%s150 + $0x18] sm:$0xff]
    %v155 = vld [vmem:[%s150 + $0x20] sm:$0xff]
    %v156 = vld [vmem:[%s150 + $0x28] sm:$0xff]
    %v157 = vadd.f32 %v144, %v151
    %v158 = vadd.f32 %v145, %v152
    %v159 = vadd.f32 %v146, %v153
    %v160 = vadd.f32 %v147, %v154
    %v161 = vadd.f32 %v148, %v155
    %v162 = vadd.f32 %v149, %v156
    %s163 = scalar_lea.vmem [#allocation2], 288
    %v164 = vld [vmem:[%s163] sm:$0xff]
    %v165 = vld [vmem:[%s163 + $0x8] sm:$0xff]
    %v166 = vld [vmem:[%s163 + $0x10] sm:$0xff]
    %v167 = vld [vmem:[%s163 + $0x18] sm:$0xff]
    %v168 = vld [vmem:[%s163 + $0x20] sm:$0xff]
    %v169 = vld [vmem:[%s163 + $0x28] sm:$0xff]
    %v170 = vadd.f32 %v157, %v164
    %v171 = vadd.f32 %v158, %v165
    %v172 = vadd.f32 %v159, %v166
    %v173 = vadd.f32 %v160, %v167
    %v174 = vadd.f32 %v161, %v168
    %v175 = vadd.f32 %v162, %v169
    %s176 = scalar_lea.vmem [#allocation2], 336
    %v177 = vld [vmem:[%s176] sm:$0xff]
    %v178 = vld [vmem:[%s176 + $0x8] sm:$0xff]
    %v179 = vld [vmem:[%s176 + $0x10] sm:$0xff]
    %v180 = vld [vmem:[%s176 + $0x18] sm:$0xff]
    %v181 = vld [vmem:[%s176 + $0x20] sm:$0xff]
    %v182 = vld [vmem:[%s176 + $0x28] sm:$0xff]
    %v183 = vadd.f32 %v170, %v177
    %v184 = vadd.f32 %v171, %v178
    %v185 = vadd.f32 %v172, %v179
    %v186 = vadd.f32 %v173, %v180
    %v187 = vadd.f32 %v174, %v181
    %v188 = vadd.f32 %v175, %v182
    %s189 = scalar_lea.vmem [#allocation2], 384
    %v190 = vld [vmem:[%s189] sm:$0xff]
    %v191 = vld [vmem:[%s189 + $0x8] sm:$0xff]
    %v192 = vld [vmem:[%s189 + $0x10] sm:$0xff]
    %v193 = vld [vmem:[%s189 + $0x18] sm:$0xff]
    %v194 = vld [vmem:[%s189 + $0x20] sm:$0xff]
    %v195 = vld [vmem:[%s189 + $0x28] sm:$0xff]
    %v196 = vadd.f32 %v183, %v190
    %v197 = vadd.f32 %v184, %v191
    %v198 = vadd.f32 %v185, %v192
    %v199 = vadd.f32 %v186, %v193
    %v200 = vadd.f32 %v187, %v194
    %v201 = vadd.f32 %v188, %v195
    %s202 = scalar_lea.vmem [#allocation2], 432
    %v203 = vld [vmem:[%s202] sm:$0xff]
    %v204 = vld [vmem:[%s202 + $0x8] sm:$0xff]
    %v205 = vld [vmem:[%s202 + $0x10] sm:$0xff]
    %v206 = vld [vmem:[%s202 + $0x18] sm:$0xff]
    %v207 = vld [vmem:[%s202 + $0x20] sm:$0xff]
    %v208 = vld [vmem:[%s202 + $0x28] sm:$0xff]
    %v209 = vadd.f32 %v196, %v203
    %v210 = vadd.f32 %v197, %v204
    %v211 = vadd.f32 %v198, %v205
    %v212 = vadd.f32 %v199, %v206
    %v213 = vadd.f32 %v200, %v207
    %v214 = vadd.f32 %v201, %v208
    %vm215 = vcmp.gt.f32.partialorder %v209, 0.0
    %vm216 = vcmp.gt.f32.partialorder %v210, 0.0
    %vm217 = vcmp.gt.f32.partialorder %v211, 0.0
    %vm218 = vcmp.gt.f32.partialorder %v212, 0.0
    %vm219 = vcmp.gt.f32.partialorder %v213, 0.0
    %vm220 = vcmp.gt.f32.partialorder %v214, 0.0
    %v221 = vld [vmem:[%s2] sm:$0xff]
    %v222 = vld [vmem:[%s2 + $0x8] sm:$0xff]
    %v223 = vld [vmem:[%s2 + $0x10] sm:$0xff]
    %v224 = vld [vmem:[%s2 + $0x18] sm:$0xff]
    %v225 = vld [vmem:[%s2 + $0x20] sm:$0xff]
    %v226 = vld [vmem:[%s2 + $0x28] sm:$0xff]
    %v227 = vld [vmem:[%s0] sm:$0xff]
    %v228 = vld [vmem:[%s0 + $0x8] sm:$0xff]
    %v229 = vld [vmem:[%s0 + $0x10] sm:$0xff]
    %v230 = vld [vmem:[%s0 + $0x18] sm:$0xff]
    %v231 = vld [vmem:[%s0 + $0x20] sm:$0xff]
    %v232 = vld [vmem:[%s0 + $0x28] sm:$0xff]
    %v233 = vld [vmem:[%s4] sm:$0xff]
    %v234 = vld [vmem:[%s4 + $0x8] sm:$0xff]
    %v235 = vld [vmem:[%s5] sm:$0x1]
    %v236 = vld [vmem:[%s6] sm:$0x1]
    %v237 = vld [vmem:[%s7] sm:$0x1]
    %vm238 = vcmask 130048
    %v240 = vsel %vm238, %v227, 0
    %v243 = vsel %vm238, %v228, 0
    %v246 = vsel %vm238, %v229, 0
    %v249 = vsel %vm238, %v230, 0
    %v252 = vsel %vm238, %v231, 0
    %v255 = vsel %vm238, %v232, 0
    %257 = vmatpush.msra.mxu0 0.0
    %258 = vmatpush.msra.mxu0 0.0
    %259 = vmatpush.msra.mxu0 0.0
    %260 = vmatpush.msra.mxu0 0.0
    %261 = vmatpush.msra.mxu0 0.0
    %262 = vmatpush.msra.mxu0 0.0
    %263 = vmatpush.msra.mxu0 0.0
    %264 = vmatpush.msra.mxu0 0.0
    %265 = vmatpush.msra.mxu0 0.0
    %266 = vmatpush.msra.mxu0 0.0
    %267 = vmatpush.msra.mxu0 0.0
    %268 = vmatpush.msra.mxu0 0.0
    %269 = vmatpush.msra.mxu0 0.0
    %270 = vmatpush.msra.mxu0 0.0
    %271 = vmatpush.msra.mxu0 %v234
    %272 = vmatpush.msra.mxu0 %v233
    %273 = vmatmul.f32.gmra.mxu0 %v240
    %v274 = vpop.f32.mrf.mxu0
    %v275 = vadd.f32 0.0, %v274
    %276 = vmatmul.f32.gmra.mxu0 %v243
    %v277 = vpop.f32.mrf.mxu0
    %v278 = vadd.f32 0.0, %v277
    %279 = vmatmul.f32.gmra.mxu0 %v246
    %v280 = vpop.f32.mrf.mxu0
    %v281 = vadd.f32 0.0, %v280
    %282 = vmatmul.f32.gmra.mxu0 %v249
    %v283 = vpop.f32.mrf.mxu0
    %v284 = vadd.f32 0.0, %v283
    %285 = vmatmul.f32.gmra.mxu0 %v252
    %v286 = vpop.f32.mrf.mxu0
    %v287 = vadd.f32 0.0, %v286
    %288 = vmatmul.f32.gmra.mxu0 %v255
    %v289 = vpop.f32.mrf.mxu0
    %v290 = vadd.f32 0.0, %v289
    %291 = vdwg.mxu0
    %v293 = vperm.slane %v236, 0
    %v295 = vmul.f32 %v275, %v293
    %v296 = vmul.f32 %v278, %v293
    %v297 = vmul.f32 %v281, %v293
    %v298 = vmul.f32 %v284, %v293
    %v299 = vmul.f32 %v287, %v293
    %v300 = vmul.f32 %v290, %v293
    %301 = vadd.xlane.f32.xlu0 %v295
    %v302 = vpop.xlane.xlu0 %301
    %303 = vadd.xlane.f32.xlu0 %v296
    %v304 = vpop.xlane.xlu0 %303
    %305 = vadd.xlane.f32.xlu0 %v297
    %v306 = vpop.xlane.xlu0 %305
    %307 = vadd.xlane.f32.xlu0 %v298
    %v308 = vpop.xlane.xlu0 %307
    %309 = vadd.xlane.f32.xlu0 %v299
    %v310 = vpop.xlane.xlu0 %309
    %311 = vadd.xlane.f32.xlu0 %v300
    %v312 = vpop.xlane.xlu0 %311
    %313 = vmatpush.xpose.msra.mxu0 0.0
    %314 = vmatpush.xpose.msra.mxu0 0.0
    %315 = vmatpush.xpose.msra.mxu0 0.0
    %316 = vmatpush.xpose.msra.mxu0 0.0
    %317 = vmatpush.xpose.msra.mxu0 0.0
    %318 = vmatpush.xpose.msra.mxu0 0.0
    %319 = vmatpush.xpose.msra.mxu0 0.0
    %320 = vmatpush.xpose.msra.mxu0 0.0
    %321 = vmatpush.xpose.msra.mxu0 0.0
    %322 = vmatpush.xpose.msra.mxu0 0.0
    %323 = vmatpush.xpose.msra.mxu0 %v290
    %324 = vmatpush.xpose.msra.mxu0 %v287
    %325 = vmatpush.xpose.msra.mxu0 %v284
    %326 = vmatpush.xpose.msra.mxu0 %v281
    %327 = vmatpush.xpose.msra.mxu0 %v278
    %328 = vmatpush.xpose.msra.mxu0 %v275
    %329 = vmatmul.f32.gmra.mxu0 %v235
    %v330 = vpop.f32.mrf.mxu0
    %v331 = vadd.f32 0.0, %v330
    %332 = vdwg.mxu0
    %v333 = vperm.slane %v331, 0
    %v334 = vadd.f32 %v302, %v333
    %v335 = vadd.f32 %v304, %v333
    %v336 = vadd.f32 %v306, %v333
    %v337 = vadd.f32 %v308, %v333
    %v338 = vadd.f32 %v310, %v333
    %v339 = vadd.f32 %v312, %v333
    %vm340 = vcmp.gt.f32.partialorder %v334, 0.0
    %vm341 = vcmp.gt.f32.partialorder %v335, 0.0
    %vm342 = vcmp.gt.f32.partialorder %v336, 0.0
    %vm343 = vcmp.gt.f32.partialorder %v337, 0.0
    %vm344 = vcmp.gt.f32.partialorder %v338, 0.0
    %vm345 = vcmp.gt.f32.partialorder %v339, 0.0
    %v346 = vmul.f32 %v334, 0.2
    %v347 = vmul.f32 %v335, 0.2
    %v348 = vmul.f32 %v336, 0.2
    %v349 = vmul.f32 %v337, 0.2
    %v350 = vmul.f32 %v338, 0.2
    %v351 = vmul.f32 %v339, 0.2
    %v352 = vsel %vm340, %v334, %v346
    %v353 = vsel %vm341, %v335, %v347
    %v354 = vsel %vm342, %v336, %v348
    %v355 = vsel %vm343, %v337, %v349
    %v356 = vsel %vm344, %v338, %v350
    %v357 = vsel %vm345, %v339, %v351
    %v358 = vsel %vm215, %v352, -1e+30
    %v359 = vsel %vm216, %v353, -1e+30
    %v360 = vsel %vm217, %v354, -1e+30
    %v361 = vsel %vm218, %v355, -1e+30
    %v362 = vsel %vm219, %v356, -1e+30
    %v363 = vsel %vm220, %v357, -1e+30
    %vm364 = vcmask 392192
    %v365 = vsel %vm364, %v358, -inf
    %366 = vmax.xlane.f32.xlu0 %v365
    %v367 = vpop.xlane.xlu0 %366
    %v368 = vsel %vm364, %v359, -inf
    %369 = vmax.xlane.f32.xlu0 %v368
    %v370 = vpop.xlane.xlu0 %369
    %v371 = vsel %vm364, %v360, -inf
    %372 = vmax.xlane.f32.xlu0 %v371
    %v373 = vpop.xlane.xlu0 %372
    %v374 = vsel %vm364, %v361, -inf
    %375 = vmax.xlane.f32.xlu0 %v374
    %v376 = vpop.xlane.xlu0 %375
    %v377 = vsel %vm364, %v362, -inf
    %378 = vmax.xlane.f32.xlu0 %v377
    %v379 = vpop.xlane.xlu0 %378
    %v380 = vsel %vm364, %v363, -inf
    %381 = vmax.xlane.f32.xlu0 %v380
    %v382 = vpop.xlane.xlu0 %381
    %v383 = vsub.f32 %v358, %v367
    %v384 = vsub.f32 %v359, %v370
    %v385 = vsub.f32 %v360, %v373
    %v386 = vsub.f32 %v361, %v376
    %v387 = vsub.f32 %v362, %v379
    %v388 = vsub.f32 %v363, %v382
    %v389 = vmul.f32 %v383, 1.442695
    %v390 = vpow.pop %v389
    %v391 = vmul.f32 %v384, 1.442695
    %v392 = vpow.pop %v391
    %v393 = vmul.f32 %v385, 1.442695
    %v394 = vpow.pop %v393
    %v395 = vmul.f32 %v386, 1.442695
    %v396 = vpow.pop %v395
    %v397 = vmul.f32 %v387, 1.442695
    %v398 = vpow.pop %v397
    %v399 = vmul.f32 %v388, 1.442695
    %v400 = vpow.pop %v399
    %v401 = vmul.f32 %v390, %v92
    %v402 = vmul.f32 %v392, %v93
    %v403 = vmul.f32 %v394, %v94
    %v404 = vmul.f32 %v396, %v95
    %v405 = vmul.f32 %v398, %v96
    %v406 = vmul.f32 %v400, %v97
    %v407 = vsel %vm364, %v401, 0.0
    %408 = vadd.xlane.f32.xlu0 %v407
    %v409 = vpop.xlane.xlu0 %408
    %v410 = vsel %vm364, %v402, 0.0
    %411 = vadd.xlane.f32.xlu0 %v410
    %v412 = vpop.xlane.xlu0 %411
    %v413 = vsel %vm364, %v403, 0.0
    %414 = vadd.xlane.f32.xlu0 %v413
    %v415 = vpop.xlane.xlu0 %414
    %v416 = vsel %vm364, %v404, 0.0
    %417 = vadd.xlane.f32.xlu0 %v416
    %v418 = vpop.xlane.xlu0 %417
    %v419 = vsel %vm364, %v405, 0.0
    %420 = vadd.xlane.f32.xlu0 %v419
    %v421 = vpop.xlane.xlu0 %420
    %v422 = vsel %vm364, %v406, 0.0
    %423 = vadd.xlane.f32.xlu0 %v422
    %v424 = vpop.xlane.xlu0 %423
    %v425 = vmax.f32 %v409, 1e-20
    %v426 = vmax.f32 %v412, 1e-20
    %v427 = vmax.f32 %v415, 1e-20
    %v428 = vmax.f32 %v418, 1e-20
    %v429 = vmax.f32 %v421, 1e-20
    %v430 = vmax.f32 %v424, 1e-20
    %v431 = vrcp.pop %v425
    %v432 = vrcp.pop %v426
    %v433 = vrcp.pop %v427
    %v434 = vrcp.pop %v428
    %v435 = vrcp.pop %v429
    %v436 = vrcp.pop %v430
    %v437 = vmul.f32 %v401, %v431
    %v438 = vmul.f32 %v402, %v432
    %v439 = vmul.f32 %v403, %v433
    %v440 = vmul.f32 %v404, %v434
    %v441 = vmul.f32 %v405, %v435
    %v442 = vmul.f32 %v406, %v436
    %v443 = vadd.f32 %v437, 0.0
    %v444 = vadd.f32 %v438, 0.0
    %v445 = vadd.f32 %v439, 0.0
    %v446 = vadd.f32 %v440, 0.0
    %v447 = vadd.f32 %v441, 0.0
    %v448 = vadd.f32 %v442, 0.0
    %v449 = vmul.f32 %v390, %v99
    %v450 = vmul.f32 %v392, %v100
    %v451 = vmul.f32 %v394, %v101
    %v452 = vmul.f32 %v396, %v102
    %v453 = vmul.f32 %v398, %v103
    %v454 = vmul.f32 %v400, %v104
    %v455 = vsel %vm364, %v449, 0.0
    %456 = vadd.xlane.f32.xlu0 %v455
    %v457 = vpop.xlane.xlu0 %456
    %v458 = vsel %vm364, %v450, 0.0
    %459 = vadd.xlane.f32.xlu0 %v458
    %v460 = vpop.xlane.xlu0 %459
    %v461 = vsel %vm364, %v451, 0.0
    %462 = vadd.xlane.f32.xlu0 %v461
    %v463 = vpop.xlane.xlu0 %462
    %v464 = vsel %vm364, %v452, 0.0
    %465 = vadd.xlane.f32.xlu0 %v464
    %v466 = vpop.xlane.xlu0 %465
    %v467 = vsel %vm364, %v453, 0.0
    %468 = vadd.xlane.f32.xlu0 %v467
    %v469 = vpop.xlane.xlu0 %468
    %v470 = vsel %vm364, %v454, 0.0
    %471 = vadd.xlane.f32.xlu0 %v470
    %v472 = vpop.xlane.xlu0 %471
    %v473 = vmax.f32 %v457, 1e-20
    %v474 = vmax.f32 %v460, 1e-20
    %v475 = vmax.f32 %v463, 1e-20
    %v476 = vmax.f32 %v466, 1e-20
    %v477 = vmax.f32 %v469, 1e-20
    %v478 = vmax.f32 %v472, 1e-20
    %v479 = vrcp.pop %v473
    %v480 = vrcp.pop %v474
    %v481 = vrcp.pop %v475
    %v482 = vrcp.pop %v476
    %v483 = vrcp.pop %v477
    %v484 = vrcp.pop %v478
    %v485 = vmul.f32 %v449, %v479
    %v486 = vmul.f32 %v450, %v480
    %v487 = vmul.f32 %v451, %v481
    %v488 = vmul.f32 %v452, %v482
    %v489 = vmul.f32 %v453, %v483
    %v490 = vmul.f32 %v454, %v484
    %v491 = vadd.f32 %v443, %v485
    %v492 = vadd.f32 %v444, %v486
    %v493 = vadd.f32 %v445, %v487
    %v494 = vadd.f32 %v446, %v488
    %v495 = vadd.f32 %v447, %v489
    %v496 = vadd.f32 %v448, %v490
    %v497 = vmul.f32 %v390, %v112
    %v498 = vmul.f32 %v392, %v113
    %v499 = vmul.f32 %v394, %v114
    %v500 = vmul.f32 %v396, %v115
    %v501 = vmul.f32 %v398, %v116
    %v502 = vmul.f32 %v400, %v117
    %v503 = vsel %vm364, %v497, 0.0
    %504 = vadd.xlane.f32.xlu0 %v503
    %v505 = vpop.xlane.xlu0 %504
    %v506 = vsel %vm364, %v498, 0.0
    %507 = vadd.xlane.f32.xlu0 %v506
    %v508 = vpop.xlane.xlu0 %507
    %v509 = vsel %vm364, %v499, 0.0
    %510 = vadd.xlane.f32.xlu0 %v509
    %v511 = vpop.xlane.xlu0 %510
    %v512 = vsel %vm364, %v500, 0.0
    %513 = vadd.xlane.f32.xlu0 %v512
    %v514 = vpop.xlane.xlu0 %513
    %v515 = vsel %vm364, %v501, 0.0
    %516 = vadd.xlane.f32.xlu0 %v515
    %v517 = vpop.xlane.xlu0 %516
    %v518 = vsel %vm364, %v502, 0.0
    %519 = vadd.xlane.f32.xlu0 %v518
    %v520 = vpop.xlane.xlu0 %519
    %v521 = vmax.f32 %v505, 1e-20
    %v522 = vmax.f32 %v508, 1e-20
    %v523 = vmax.f32 %v511, 1e-20
    %v524 = vmax.f32 %v514, 1e-20
    %v525 = vmax.f32 %v517, 1e-20
    %v526 = vmax.f32 %v520, 1e-20
    %v527 = vrcp.pop %v521
    %v528 = vrcp.pop %v522
    %v529 = vrcp.pop %v523
    %v530 = vrcp.pop %v524
    %v531 = vrcp.pop %v525
    %v532 = vrcp.pop %v526
    %v533 = vmul.f32 %v497, %v527
    %v534 = vmul.f32 %v498, %v528
    %v535 = vmul.f32 %v499, %v529
    %v536 = vmul.f32 %v500, %v530
    %v537 = vmul.f32 %v501, %v531
    %v538 = vmul.f32 %v502, %v532
    %v539 = vadd.f32 %v491, %v533
    %v540 = vadd.f32 %v492, %v534
    %v541 = vadd.f32 %v493, %v535
    %v542 = vadd.f32 %v494, %v536
    %v543 = vadd.f32 %v495, %v537
    %v544 = vadd.f32 %v496, %v538
    %v545 = vmul.f32 %v390, %v125
    %v546 = vmul.f32 %v392, %v126
    %v547 = vmul.f32 %v394, %v127
    %v548 = vmul.f32 %v396, %v128
    %v549 = vmul.f32 %v398, %v129
    %v550 = vmul.f32 %v400, %v130
    %v551 = vsel %vm364, %v545, 0.0
    %552 = vadd.xlane.f32.xlu0 %v551
    %v553 = vpop.xlane.xlu0 %552
    %v554 = vsel %vm364, %v546, 0.0
    %555 = vadd.xlane.f32.xlu0 %v554
    %v556 = vpop.xlane.xlu0 %555
    %v557 = vsel %vm364, %v547, 0.0
    %558 = vadd.xlane.f32.xlu0 %v557
    %v559 = vpop.xlane.xlu0 %558
    %v560 = vsel %vm364, %v548, 0.0
    %561 = vadd.xlane.f32.xlu0 %v560
    %v562 = vpop.xlane.xlu0 %561
    %v563 = vsel %vm364, %v549, 0.0
    %564 = vadd.xlane.f32.xlu0 %v563
    %v565 = vpop.xlane.xlu0 %564
    %v566 = vsel %vm364, %v550, 0.0
    %567 = vadd.xlane.f32.xlu0 %v566
    %v568 = vpop.xlane.xlu0 %567
    %v569 = vmax.f32 %v553, 1e-20
    %v570 = vmax.f32 %v556, 1e-20
    %v571 = vmax.f32 %v559, 1e-20
    %v572 = vmax.f32 %v562, 1e-20
    %v573 = vmax.f32 %v565, 1e-20
    %v574 = vmax.f32 %v568, 1e-20
    %v575 = vrcp.pop %v569
    %v576 = vrcp.pop %v570
    %v577 = vrcp.pop %v571
    %v578 = vrcp.pop %v572
    %v579 = vrcp.pop %v573
    %v580 = vrcp.pop %v574
    %v581 = vmul.f32 %v545, %v575
    %v582 = vmul.f32 %v546, %v576
    %v583 = vmul.f32 %v547, %v577
    %v584 = vmul.f32 %v548, %v578
    %v585 = vmul.f32 %v549, %v579
    %v586 = vmul.f32 %v550, %v580
    %v587 = vadd.f32 %v539, %v581
    %v588 = vadd.f32 %v540, %v582
    %v589 = vadd.f32 %v541, %v583
    %v590 = vadd.f32 %v542, %v584
    %v591 = vadd.f32 %v543, %v585
    %v592 = vadd.f32 %v544, %v586
    %v593 = vmul.f32 %v390, %v138
    %v594 = vmul.f32 %v392, %v139
    %v595 = vmul.f32 %v394, %v140
    %v596 = vmul.f32 %v396, %v141
    %v597 = vmul.f32 %v398, %v142
    %v598 = vmul.f32 %v400, %v143
    %v599 = vsel %vm364, %v593, 0.0
    %600 = vadd.xlane.f32.xlu0 %v599
    %v601 = vpop.xlane.xlu0 %600
    %v602 = vsel %vm364, %v594, 0.0
    %603 = vadd.xlane.f32.xlu0 %v602
    %v604 = vpop.xlane.xlu0 %603
    %v605 = vsel %vm364, %v595, 0.0
    %606 = vadd.xlane.f32.xlu0 %v605
    %v607 = vpop.xlane.xlu0 %606
    %v608 = vsel %vm364, %v596, 0.0
    %609 = vadd.xlane.f32.xlu0 %v608
    %v610 = vpop.xlane.xlu0 %609
    %v611 = vsel %vm364, %v597, 0.0
    %612 = vadd.xlane.f32.xlu0 %v611
    %v613 = vpop.xlane.xlu0 %612
    %v614 = vsel %vm364, %v598, 0.0
    %615 = vadd.xlane.f32.xlu0 %v614
    %v616 = vpop.xlane.xlu0 %615
    %v617 = vmax.f32 %v601, 1e-20
    %v618 = vmax.f32 %v604, 1e-20
    %v619 = vmax.f32 %v607, 1e-20
    %v620 = vmax.f32 %v610, 1e-20
    %v621 = vmax.f32 %v613, 1e-20
    %v622 = vmax.f32 %v616, 1e-20
    %v623 = vrcp.pop %v617
    %v624 = vrcp.pop %v618
    %v625 = vrcp.pop %v619
    %v626 = vrcp.pop %v620
    %v627 = vrcp.pop %v621
    %v628 = vrcp.pop %v622
    %v629 = vmul.f32 %v593, %v623
    %v630 = vmul.f32 %v594, %v624
    %v631 = vmul.f32 %v595, %v625
    %v632 = vmul.f32 %v596, %v626
    %v633 = vmul.f32 %v597, %v627
    %v634 = vmul.f32 %v598, %v628
    %v635 = vadd.f32 %v587, %v629
    %v636 = vadd.f32 %v588, %v630
    %v637 = vadd.f32 %v589, %v631
    %v638 = vadd.f32 %v590, %v632
    %v639 = vadd.f32 %v591, %v633
    %v640 = vadd.f32 %v592, %v634
    %v641 = vmul.f32 %v390, %v151
    %v642 = vmul.f32 %v392, %v152
    %v643 = vmul.f32 %v394, %v153
    %v644 = vmul.f32 %v396, %v154
    %v645 = vmul.f32 %v398, %v155
    %v646 = vmul.f32 %v400, %v156
    %v647 = vsel %vm364, %v641, 0.0
    %648 = vadd.xlane.f32.xlu0 %v647
    %v649 = vpop.xlane.xlu0 %648
    %v650 = vsel %vm364, %v642, 0.0
    %651 = vadd.xlane.f32.xlu0 %v650
    %v652 = vpop.xlane.xlu0 %651
    %v653 = vsel %vm364, %v643, 0.0
    %654 = vadd.xlane.f32.xlu0 %v653
    %v655 = vpop.xlane.xlu0 %654
    %v656 = vsel %vm364, %v644, 0.0
    %657 = vadd.xlane.f32.xlu0 %v656
    %v658 = vpop.xlane.xlu0 %657
    %v659 = vsel %vm364, %v645, 0.0
    %660 = vadd.xlane.f32.xlu0 %v659
    %v661 = vpop.xlane.xlu0 %660
    %v662 = vsel %vm364, %v646, 0.0
    %663 = vadd.xlane.f32.xlu0 %v662
    %v664 = vpop.xlane.xlu0 %663
    %v665 = vmax.f32 %v649, 1e-20
    %v666 = vmax.f32 %v652, 1e-20
    %v667 = vmax.f32 %v655, 1e-20
    %v668 = vmax.f32 %v658, 1e-20
    %v669 = vmax.f32 %v661, 1e-20
    %v670 = vmax.f32 %v664, 1e-20
    %v671 = vrcp.pop %v665
    %v672 = vrcp.pop %v666
    %v673 = vrcp.pop %v667
    %v674 = vrcp.pop %v668
    %v675 = vrcp.pop %v669
    %v676 = vrcp.pop %v670
    %v677 = vmul.f32 %v641, %v671
    %v678 = vmul.f32 %v642, %v672
    %v679 = vmul.f32 %v643, %v673
    %v680 = vmul.f32 %v644, %v674
    %v681 = vmul.f32 %v645, %v675
    %v682 = vmul.f32 %v646, %v676
    %v683 = vadd.f32 %v635, %v677
    %v684 = vadd.f32 %v636, %v678
    %v685 = vadd.f32 %v637, %v679
    %v686 = vadd.f32 %v638, %v680
    %v687 = vadd.f32 %v639, %v681
    %v688 = vadd.f32 %v640, %v682
    %v689 = vmul.f32 %v390, %v164
    %v690 = vmul.f32 %v392, %v165
    %v691 = vmul.f32 %v394, %v166
    %v692 = vmul.f32 %v396, %v167
    %v693 = vmul.f32 %v398, %v168
    %v694 = vmul.f32 %v400, %v169
    %v695 = vsel %vm364, %v689, 0.0
    %696 = vadd.xlane.f32.xlu0 %v695
    %v697 = vpop.xlane.xlu0 %696
    %v698 = vsel %vm364, %v690, 0.0
    %699 = vadd.xlane.f32.xlu0 %v698
    %v700 = vpop.xlane.xlu0 %699
    %v701 = vsel %vm364, %v691, 0.0
    %702 = vadd.xlane.f32.xlu0 %v701
    %v703 = vpop.xlane.xlu0 %702
    %v704 = vsel %vm364, %v692, 0.0
    %705 = vadd.xlane.f32.xlu0 %v704
    %v706 = vpop.xlane.xlu0 %705
    %v707 = vsel %vm364, %v693, 0.0
    %708 = vadd.xlane.f32.xlu0 %v707
    %v709 = vpop.xlane.xlu0 %708
    %v710 = vsel %vm364, %v694, 0.0
    %711 = vadd.xlane.f32.xlu0 %v710
    %v712 = vpop.xlane.xlu0 %711
    %v713 = vmax.f32 %v697, 1e-20
    %v714 = vmax.f32 %v700, 1e-20
    %v715 = vmax.f32 %v703, 1e-20
    %v716 = vmax.f32 %v706, 1e-20
    %v717 = vmax.f32 %v709, 1e-20
    %v718 = vmax.f32 %v712, 1e-20
    %v719 = vrcp.pop %v713
    %v720 = vrcp.pop %v714
    %v721 = vrcp.pop %v715
    %v722 = vrcp.pop %v716
    %v723 = vrcp.pop %v717
    %v724 = vrcp.pop %v718
    %v725 = vmul.f32 %v689, %v719
    %v726 = vmul.f32 %v690, %v720
    %v727 = vmul.f32 %v691, %v721
    %v728 = vmul.f32 %v692, %v722
    %v729 = vmul.f32 %v693, %v723
    %v730 = vmul.f32 %v694, %v724
    %v731 = vadd.f32 %v683, %v725
    %v732 = vadd.f32 %v684, %v726
    %v733 = vadd.f32 %v685, %v727
    %v734 = vadd.f32 %v686, %v728
    %v735 = vadd.f32 %v687, %v729
    %v736 = vadd.f32 %v688, %v730
    %v737 = vmul.f32 %v390, %v177
    %v738 = vmul.f32 %v392, %v178
    %v739 = vmul.f32 %v394, %v179
    %v740 = vmul.f32 %v396, %v180
    %v741 = vmul.f32 %v398, %v181
    %v742 = vmul.f32 %v400, %v182
    %v743 = vsel %vm364, %v737, 0.0
    %744 = vadd.xlane.f32.xlu0 %v743
    %v745 = vpop.xlane.xlu0 %744
    %v746 = vsel %vm364, %v738, 0.0
    %747 = vadd.xlane.f32.xlu0 %v746
    %v748 = vpop.xlane.xlu0 %747
    %v749 = vsel %vm364, %v739, 0.0
    %750 = vadd.xlane.f32.xlu0 %v749
    %v751 = vpop.xlane.xlu0 %750
    %v752 = vsel %vm364, %v740, 0.0
    %753 = vadd.xlane.f32.xlu0 %v752
    %v754 = vpop.xlane.xlu0 %753
    %v755 = vsel %vm364, %v741, 0.0
    %756 = vadd.xlane.f32.xlu0 %v755
    %v757 = vpop.xlane.xlu0 %756
    %v758 = vsel %vm364, %v742, 0.0
    %759 = vadd.xlane.f32.xlu0 %v758
    %v760 = vpop.xlane.xlu0 %759
    %v761 = vmax.f32 %v745, 1e-20
    %v762 = vmax.f32 %v748, 1e-20
    %v763 = vmax.f32 %v751, 1e-20
    %v764 = vmax.f32 %v754, 1e-20
    %v765 = vmax.f32 %v757, 1e-20
    %v766 = vmax.f32 %v760, 1e-20
    %v767 = vrcp.pop %v761
    %v768 = vrcp.pop %v762
    %v769 = vrcp.pop %v763
    %v770 = vrcp.pop %v764
    %v771 = vrcp.pop %v765
    %v772 = vrcp.pop %v766
    %v773 = vmul.f32 %v737, %v767
    %v774 = vmul.f32 %v738, %v768
    %v775 = vmul.f32 %v739, %v769
    %v776 = vmul.f32 %v740, %v770
    %v777 = vmul.f32 %v741, %v771
    %v778 = vmul.f32 %v742, %v772
    %v779 = vadd.f32 %v731, %v773
    %v780 = vadd.f32 %v732, %v774
    %v781 = vadd.f32 %v733, %v775
    %v782 = vadd.f32 %v734, %v776
    %v783 = vadd.f32 %v735, %v777
    %v784 = vadd.f32 %v736, %v778
    %v785 = vmul.f32 %v390, %v190
    %v786 = vmul.f32 %v392, %v191
    %v787 = vmul.f32 %v394, %v192
    %v788 = vmul.f32 %v396, %v193
    %v789 = vmul.f32 %v398, %v194
    %v790 = vmul.f32 %v400, %v195
    %v791 = vsel %vm364, %v785, 0.0
    %792 = vadd.xlane.f32.xlu0 %v791
    %v793 = vpop.xlane.xlu0 %792
    %v794 = vsel %vm364, %v786, 0.0
    %795 = vadd.xlane.f32.xlu0 %v794
    %v796 = vpop.xlane.xlu0 %795
    %v797 = vsel %vm364, %v787, 0.0
    %798 = vadd.xlane.f32.xlu0 %v797
    %v799 = vpop.xlane.xlu0 %798
    %v800 = vsel %vm364, %v788, 0.0
    %801 = vadd.xlane.f32.xlu0 %v800
    %v802 = vpop.xlane.xlu0 %801
    %v803 = vsel %vm364, %v789, 0.0
    %804 = vadd.xlane.f32.xlu0 %v803
    %v805 = vpop.xlane.xlu0 %804
    %v806 = vsel %vm364, %v790, 0.0
    %807 = vadd.xlane.f32.xlu0 %v806
    %v808 = vpop.xlane.xlu0 %807
    %v809 = vmax.f32 %v793, 1e-20
    %v810 = vmax.f32 %v796, 1e-20
    %v811 = vmax.f32 %v799, 1e-20
    %v812 = vmax.f32 %v802, 1e-20
    %v813 = vmax.f32 %v805, 1e-20
    %v814 = vmax.f32 %v808, 1e-20
    %v815 = vrcp.pop %v809
    %v816 = vrcp.pop %v810
    %v817 = vrcp.pop %v811
    %v818 = vrcp.pop %v812
    %v819 = vrcp.pop %v813
    %v820 = vrcp.pop %v814
    %v821 = vmul.f32 %v785, %v815
    %v822 = vmul.f32 %v786, %v816
    %v823 = vmul.f32 %v787, %v817
    %v824 = vmul.f32 %v788, %v818
    %v825 = vmul.f32 %v789, %v819
    %v826 = vmul.f32 %v790, %v820
    %v827 = vadd.f32 %v779, %v821
    %v828 = vadd.f32 %v780, %v822
    %v829 = vadd.f32 %v781, %v823
    %v830 = vadd.f32 %v782, %v824
    %v831 = vadd.f32 %v783, %v825
    %v832 = vadd.f32 %v784, %v826
    %v833 = vmul.f32 %v390, %v203
    %v834 = vmul.f32 %v392, %v204
    %v835 = vmul.f32 %v394, %v205
    %v836 = vmul.f32 %v396, %v206
    %v837 = vmul.f32 %v398, %v207
    %v838 = vmul.f32 %v400, %v208
    %v839 = vsel %vm364, %v833, 0.0
    %840 = vadd.xlane.f32.xlu0 %v839
    %v841 = vpop.xlane.xlu0 %840
    %v842 = vsel %vm364, %v834, 0.0
    %843 = vadd.xlane.f32.xlu0 %v842
    %v844 = vpop.xlane.xlu0 %843
    %v845 = vsel %vm364, %v835, 0.0
    %846 = vadd.xlane.f32.xlu0 %v845
    %v847 = vpop.xlane.xlu0 %846
    %v848 = vsel %vm364, %v836, 0.0
    %849 = vadd.xlane.f32.xlu0 %v848
    %v850 = vpop.xlane.xlu0 %849
    %v851 = vsel %vm364, %v837, 0.0
    %852 = vadd.xlane.f32.xlu0 %v851
    %v853 = vpop.xlane.xlu0 %852
    %v854 = vsel %vm364, %v838, 0.0
    %855 = vadd.xlane.f32.xlu0 %v854
    %v856 = vpop.xlane.xlu0 %855
    %v857 = vmax.f32 %v841, 1e-20
    %v858 = vmax.f32 %v844, 1e-20
    %v859 = vmax.f32 %v847, 1e-20
    %v860 = vmax.f32 %v850, 1e-20
    %v861 = vmax.f32 %v853, 1e-20
    %v862 = vmax.f32 %v856, 1e-20
    %v863 = vrcp.pop %v857
    %v864 = vrcp.pop %v858
    %v865 = vrcp.pop %v859
    %v866 = vrcp.pop %v860
    %v867 = vrcp.pop %v861
    %v868 = vrcp.pop %v862
    %v869 = vmul.f32 %v833, %v863
    %v870 = vmul.f32 %v834, %v864
    %v871 = vmul.f32 %v835, %v865
    %v872 = vmul.f32 %v836, %v866
    %v873 = vmul.f32 %v837, %v867
    %v874 = vmul.f32 %v838, %v868
    %v875 = vadd.f32 %v827, %v869
    %v876 = vadd.f32 %v828, %v870
    %v877 = vadd.f32 %v829, %v871
    %v878 = vadd.f32 %v830, %v872
    %v879 = vadd.f32 %v831, %v873
    %v880 = vadd.f32 %v832, %v874
    %v882 = vsel %vm364, %v875, 0
    %v885 = vsel %vm364, %v876, 0
    %v888 = vsel %vm364, %v877, 0
    %v891 = vsel %vm364, %v878, 0
    %v894 = vsel %vm364, %v879, 0
    %v897 = vsel %vm364, %v880, 0
    %899 = vmatpush.msra.mxu0 0.0
    %900 = vmatpush.msra.mxu0 0.0
    %901 = vmatpush.msra.mxu0 0.0
    %902 = vmatpush.msra.mxu0 0.0
    %903 = vmatpush.msra.mxu0 0.0
    %904 = vmatpush.msra.mxu0 0.0
    %905 = vmatpush.msra.mxu0 0.0
    %906 = vmatpush.msra.mxu0 0.0
    %907 = vmatpush.msra.mxu0 0.0
    %908 = vmatpush.msra.mxu0 0.0
    %909 = vmatpush.msra.mxu0 %v290
    %910 = vmatpush.msra.mxu0 %v287
    %911 = vmatpush.msra.mxu0 %v284
    %912 = vmatpush.msra.mxu0 %v281
    %913 = vmatpush.msra.mxu0 %v278
    %914 = vmatpush.msra.mxu0 %v275
    %915 = vmatmul.f32.gmra.mxu0 %v882
    %v916 = vpop.f32.mrf.mxu0
    %v917 = vadd.f32 0.0, %v916
    %918 = vmatmul.f32.gmra.mxu0 %v885
    %v919 = vpop.f32.mrf.mxu0
    %v920 = vadd.f32 0.0, %v919
    %921 = vmatmul.f32.gmra.mxu0 %v888
    %v922 = vpop.f32.mrf.mxu0
    %v923 = vadd.f32 0.0, %v922
    %924 = vmatmul.f32.gmra.mxu0 %v891
    %v925 = vpop.f32.mrf.mxu0
    %v926 = vadd.f32 0.0, %v925
    %927 = vmatmul.f32.gmra.mxu0 %v894
    %v928 = vpop.f32.mrf.mxu0
    %v929 = vadd.f32 0.0, %v928
    %930 = vmatmul.f32.gmra.mxu0 %v897
    %v931 = vpop.f32.mrf.mxu0
    %v932 = vadd.f32 0.0, %v931
    %933 = vdwg.mxu0
    %935 = vset.pattern.permute.xlu0 0
    %936 = vperm.xlu0 %935, %v221
    %v937 = vpop.permute.xlu0 %936
    %940 = vset.pattern.permute.xlu0 0
    %941 = vperm.xlu0 %940, %v222
    %v942 = vpop.permute.xlu0 %941
    %945 = vset.pattern.permute.xlu0 0
    %946 = vperm.xlu0 %945, %v223
    %v947 = vpop.permute.xlu0 %946
    %950 = vset.pattern.permute.xlu0 0
    %951 = vperm.xlu0 %950, %v224
    %v952 = vpop.permute.xlu0 %951
    %955 = vset.pattern.permute.xlu0 0
    %956 = vperm.xlu0 %955, %v225
    %v957 = vpop.permute.xlu0 %956
    %960 = vset.pattern.permute.xlu0 0
    %961 = vperm.xlu0 %960, %v226
    %v962 = vpop.permute.xlu0 %961
    %v964 = vmul.f32 %v917, %v937
    %v965 = vmul.f32 %v920, %v942
    %v966 = vmul.f32 %v923, %v947
    %v967 = vmul.f32 %v926, %v952
    %v968 = vmul.f32 %v929, %v957
    %v969 = vmul.f32 %v932, %v962
    %v971 = vperm.slane %v237, 0
    %v973 = vadd.f32 %v964, %v971
    %v974 = vadd.f32 %v965, %v971
    %v975 = vadd.f32 %v966, %v971
    %v976 = vadd.f32 %v967, %v971
    %v977 = vadd.f32 %v968, %v971
    %v978 = vadd.f32 %v969, %v971
    %vm979 = vcmp.gt.f32.partialorder %v973, 0.0
    %vm980 = vcmp.gt.f32.partialorder %v974, 0.0
    %vm981 = vcmp.gt.f32.partialorder %v975, 0.0
    %vm982 = vcmp.gt.f32.partialorder %v976, 0.0
    %vm983 = vcmp.gt.f32.partialorder %v977, 0.0
    %vm984 = vcmp.gt.f32.partialorder %v978, 0.0
    %v985 = vmul.f32 %v973, 0.01
    %v986 = vmul.f32 %v974, 0.01
    %v987 = vmul.f32 %v975, 0.01
    %v988 = vmul.f32 %v976, 0.01
    %v989 = vmul.f32 %v977, 0.01
    %v990 = vmul.f32 %v978, 0.01
    %v991 = vsel %vm979, %v973, %v985
    %v992 = vsel %vm980, %v974, %v986
    %v993 = vsel %vm981, %v975, %v987
    %v994 = vsel %vm982, %v976, %v988
    %v995 = vsel %vm983, %v977, %v989
    %v996 = vsel %vm984, %v978, %v990
    %v997 = vld [vmem:[%s8] sm:$0xff]
    %v998 = vld [vmem:[%s8 + $0x8] sm:$0xff]
    %v999 = vld [vmem:[%s8 + $0x10] sm:$0xff]
    %v1000 = vld [vmem:[%s8 + $0x18] sm:$0xff]
    %v1001 = vld [vmem:[%s8 + $0x20] sm:$0xff]
    %v1002 = vld [vmem:[%s8 + $0x28] sm:$0xff]
    %v1003 = vld [vmem:[%s8 + $0x30] sm:$0xff]
    %v1004 = vld [vmem:[%s8 + $0x38] sm:$0xff]
    %v1005 = vld [vmem:[%s8 + $0x40] sm:$0xff]
    %v1006 = vld [vmem:[%s8 + $0x48] sm:$0xff]
    %v1007 = vld [vmem:[%s8 + $0x50] sm:$0xff]
    %v1008 = vld [vmem:[%s8 + $0x58] sm:$0xff]
    %v1009 = vld [vmem:[%s8 + $0x60] sm:$0xff]
    %v1010 = vld [vmem:[%s8 + $0x68] sm:$0xff]
    %v1011 = vld [vmem:[%s8 + $0x70] sm:$0xff]
    %v1012 = vld [vmem:[%s8 + $0x78] sm:$0xff]
    %v1013 = vld [vmem:[%s9] sm:$0x1]
    %v1014 = vld [vmem:[%s10] sm:$0x1]
    %v1015 = vld [vmem:[%s11] sm:$0x1]
    %1016 = vmatpush.msra.mxu0 %v1012
    %1017 = vmatpush.msra.mxu0 %v1011
    %1018 = vmatpush.msra.mxu0 %v1010
    %1019 = vmatpush.msra.mxu0 %v1009
    %1020 = vmatpush.msra.mxu0 %v1008
    %1021 = vmatpush.msra.mxu0 %v1007
    %1022 = vmatpush.msra.mxu0 %v1006
    %1023 = vmatpush.msra.mxu0 %v1005
    %1024 = vmatpush.msra.mxu0 %v1004
    %1025 = vmatpush.msra.mxu0 %v1003
    %1026 = vmatpush.msra.mxu0 %v1002
    %1027 = vmatpush.msra.mxu0 %v1001
    %1028 = vmatpush.msra.mxu0 %v1000
    %1029 = vmatpush.msra.mxu0 %v999
    %1030 = vmatpush.msra.mxu0 %v998
    %1031 = vmatpush.msra.mxu0 %v997
    %1032 = vmatmul.f32.gmra.mxu0 %v991
    %v1033 = vpop.f32.mrf.mxu0
    %v1034 = vadd.f32 0.0, %v1033
    %1035 = vmatmul.f32.gmra.mxu0 %v992
    %v1036 = vpop.f32.mrf.mxu0
    %v1037 = vadd.f32 0.0, %v1036
    %1038 = vmatmul.f32.gmra.mxu0 %v993
    %v1039 = vpop.f32.mrf.mxu0
    %v1040 = vadd.f32 0.0, %v1039
    %1041 = vmatmul.f32.gmra.mxu0 %v994
    %v1042 = vpop.f32.mrf.mxu0
    %v1043 = vadd.f32 0.0, %v1042
    %1044 = vmatmul.f32.gmra.mxu0 %v995
    %v1045 = vpop.f32.mrf.mxu0
    %v1046 = vadd.f32 0.0, %v1045
    %1047 = vmatmul.f32.gmra.mxu0 %v996
    %v1048 = vpop.f32.mrf.mxu0
    %v1049 = vadd.f32 0.0, %v1048
    %1050 = vdwg.mxu0
    %v1052 = vperm.slane %v1014, 0
    %v1054 = vmul.f32 %v1034, %v1052
    %v1055 = vmul.f32 %v1037, %v1052
    %v1056 = vmul.f32 %v1040, %v1052
    %v1057 = vmul.f32 %v1043, %v1052
    %v1058 = vmul.f32 %v1046, %v1052
    %v1059 = vmul.f32 %v1049, %v1052
    %1060 = vadd.xlane.f32.xlu0 %v1054
    %v1061 = vpop.xlane.xlu0 %1060
    %1062 = vadd.xlane.f32.xlu0 %v1055
    %v1063 = vpop.xlane.xlu0 %1062
    %1064 = vadd.xlane.f32.xlu0 %v1056
    %v1065 = vpop.xlane.xlu0 %1064
    %1066 = vadd.xlane.f32.xlu0 %v1057
    %v1067 = vpop.xlane.xlu0 %1066
    %1068 = vadd.xlane.f32.xlu0 %v1058
    %v1069 = vpop.xlane.xlu0 %1068
    %1070 = vadd.xlane.f32.xlu0 %v1059
    %v1071 = vpop.xlane.xlu0 %1070
    %1072 = vmatpush.xpose.msra.mxu0 0.0
    %1073 = vmatpush.xpose.msra.mxu0 0.0
    %1074 = vmatpush.xpose.msra.mxu0 0.0
    %1075 = vmatpush.xpose.msra.mxu0 0.0
    %1076 = vmatpush.xpose.msra.mxu0 0.0
    %1077 = vmatpush.xpose.msra.mxu0 0.0
    %1078 = vmatpush.xpose.msra.mxu0 0.0
    %1079 = vmatpush.xpose.msra.mxu0 0.0
    %1080 = vmatpush.xpose.msra.mxu0 0.0
    %1081 = vmatpush.xpose.msra.mxu0 0.0
    %1082 = vmatpush.xpose.msra.mxu0 %v1049
    %1083 = vmatpush.xpose.msra.mxu0 %v1046
    %1084 = vmatpush.xpose.msra.mxu0 %v1043
    %1085 = vmatpush.xpose.msra.mxu0 %v1040
    %1086 = vmatpush.xpose.msra.mxu0 %v1037
    %1087 = vmatpush.xpose.msra.mxu0 %v1034
    %1088 = vmatmul.f32.gmra.mxu0 %v1013
    %v1089 = vpop.f32.mrf.mxu0
    %v1090 = vadd.f32 0.0, %v1089
    %1091 = vdwg.mxu0
    %v1092 = vperm.slane %v1090, 0
    %v1093 = vadd.f32 %v1061, %v1092
    %v1094 = vadd.f32 %v1063, %v1092
    %v1095 = vadd.f32 %v1065, %v1092
    %v1096 = vadd.f32 %v1067, %v1092
    %v1097 = vadd.f32 %v1069, %v1092
    %v1098 = vadd.f32 %v1071, %v1092
    %vm1099 = vcmp.gt.f32.partialorder %v1093, 0.0
    %vm1100 = vcmp.gt.f32.partialorder %v1094, 0.0
    %vm1101 = vcmp.gt.f32.partialorder %v1095, 0.0
    %vm1102 = vcmp.gt.f32.partialorder %v1096, 0.0
    %vm1103 = vcmp.gt.f32.partialorder %v1097, 0.0
    %vm1104 = vcmp.gt.f32.partialorder %v1098, 0.0
    %v1105 = vmul.f32 %v1093, 0.2
    %v1106 = vmul.f32 %v1094, 0.2
    %v1107 = vmul.f32 %v1095, 0.2
    %v1108 = vmul.f32 %v1096, 0.2
    %v1109 = vmul.f32 %v1097, 0.2
    %v1110 = vmul.f32 %v1098, 0.2
    %v1111 = vsel %vm1099, %v1093, %v1105
    %v1112 = vsel %vm1100, %v1094, %v1106
    %v1113 = vsel %vm1101, %v1095, %v1107
    %v1114 = vsel %vm1102, %v1096, %v1108
    %v1115 = vsel %vm1103, %v1097, %v1109
    %v1116 = vsel %vm1104, %v1098, %v1110
    %v1117 = vsel %vm215, %v1111, -1e+30
    %v1118 = vsel %vm216, %v1112, -1e+30
    %v1119 = vsel %vm217, %v1113, -1e+30
    %v1120 = vsel %vm218, %v1114, -1e+30
    %v1121 = vsel %vm219, %v1115, -1e+30
    %v1122 = vsel %vm220, %v1116, -1e+30
    %v1123 = vsel %vm364, %v1117, -inf
    %1124 = vmax.xlane.f32.xlu0 %v1123
    %v1125 = vpop.xlane.xlu0 %1124
    %v1126 = vsel %vm364, %v1118, -inf
    %1127 = vmax.xlane.f32.xlu0 %v1126
    %v1128 = vpop.xlane.xlu0 %1127
    %v1129 = vsel %vm364, %v1119, -inf
    %1130 = vmax.xlane.f32.xlu0 %v1129
    %v1131 = vpop.xlane.xlu0 %1130
    %v1132 = vsel %vm364, %v1120, -inf
    %1133 = vmax.xlane.f32.xlu0 %v1132
    %v1134 = vpop.xlane.xlu0 %1133
    %v1135 = vsel %vm364, %v1121, -inf
    %1136 = vmax.xlane.f32.xlu0 %v1135
    %v1137 = vpop.xlane.xlu0 %1136
    %v1138 = vsel %vm364, %v1122, -inf
    %1139 = vmax.xlane.f32.xlu0 %v1138
    %v1140 = vpop.xlane.xlu0 %1139
    %v1141 = vsub.f32 %v1117, %v1125
    %v1142 = vsub.f32 %v1118, %v1128
    %v1143 = vsub.f32 %v1119, %v1131
    %v1144 = vsub.f32 %v1120, %v1134
    %v1145 = vsub.f32 %v1121, %v1137
    %v1146 = vsub.f32 %v1122, %v1140
    %v1147 = vmul.f32 %v1141, 1.442695
    %v1148 = vpow.pop %v1147
    %v1149 = vmul.f32 %v1142, 1.442695
    %v1150 = vpow.pop %v1149
    %v1151 = vmul.f32 %v1143, 1.442695
    %v1152 = vpow.pop %v1151
    %v1153 = vmul.f32 %v1144, 1.442695
    %v1154 = vpow.pop %v1153
    %v1155 = vmul.f32 %v1145, 1.442695
    %v1156 = vpow.pop %v1155
    %v1157 = vmul.f32 %v1146, 1.442695
    %v1158 = vpow.pop %v1157
    %v1159 = vmul.f32 %v1148, %v92
    %v1160 = vmul.f32 %v1150, %v93
    %v1161 = vmul.f32 %v1152, %v94
    %v1162 = vmul.f32 %v1154, %v95
    %v1163 = vmul.f32 %v1156, %v96
    %v1164 = vmul.f32 %v1158, %v97
    %v1165 = vsel %vm364, %v1159, 0.0
    %1166 = vadd.xlane.f32.xlu0 %v1165
    %v1167 = vpop.xlane.xlu0 %1166
    %v1168 = vsel %vm364, %v1160, 0.0
    %1169 = vadd.xlane.f32.xlu0 %v1168
    %v1170 = vpop.xlane.xlu0 %1169
    %v1171 = vsel %vm364, %v1161, 0.0
    %1172 = vadd.xlane.f32.xlu0 %v1171
    %v1173 = vpop.xlane.xlu0 %1172
    %v1174 = vsel %vm364, %v1162, 0.0
    %1175 = vadd.xlane.f32.xlu0 %v1174
    %v1176 = vpop.xlane.xlu0 %1175
    %v1177 = vsel %vm364, %v1163, 0.0
    %1178 = vadd.xlane.f32.xlu0 %v1177
    %v1179 = vpop.xlane.xlu0 %1178
    %v1180 = vsel %vm364, %v1164, 0.0
    %1181 = vadd.xlane.f32.xlu0 %v1180
    %v1182 = vpop.xlane.xlu0 %1181
    %v1183 = vmax.f32 %v1167, 1e-20
    %v1184 = vmax.f32 %v1170, 1e-20
    %v1185 = vmax.f32 %v1173, 1e-20
    %v1186 = vmax.f32 %v1176, 1e-20
    %v1187 = vmax.f32 %v1179, 1e-20
    %v1188 = vmax.f32 %v1182, 1e-20
    %v1189 = vrcp.pop %v1183
    %v1190 = vrcp.pop %v1184
    %v1191 = vrcp.pop %v1185
    %v1192 = vrcp.pop %v1186
    %v1193 = vrcp.pop %v1187
    %v1194 = vrcp.pop %v1188
    %v1195 = vmul.f32 %v1159, %v1189
    %v1196 = vmul.f32 %v1160, %v1190
    %v1197 = vmul.f32 %v1161, %v1191
    %v1198 = vmul.f32 %v1162, %v1192
    %v1199 = vmul.f32 %v1163, %v1193
    %v1200 = vmul.f32 %v1164, %v1194
    %v1201 = vadd.f32 %v1195, 0.0
    %v1202 = vadd.f32 %v1196, 0.0
    %v1203 = vadd.f32 %v1197, 0.0
    %v1204 = vadd.f32 %v1198, 0.0
    %v1205 = vadd.f32 %v1199, 0.0
    %v1206 = vadd.f32 %v1200, 0.0
    %v1207 = vmul.f32 %v1148, %v99
    %v1208 = vmul.f32 %v1150, %v100
    %v1209 = vmul.f32 %v1152, %v101
    %v1210 = vmul.f32 %v1154, %v102
    %v1211 = vmul.f32 %v1156, %v103
    %v1212 = vmul.f32 %v1158, %v104
    %v1213 = vsel %vm364, %v1207, 0.0
    %1214 = vadd.xlane.f32.xlu0 %v1213
    %v1215 = vpop.xlane.xlu0 %1214
    %v1216 = vsel %vm364, %v1208, 0.0
    %1217 = vadd.xlane.f32.xlu0 %v1216
    %v1218 = vpop.xlane.xlu0 %1217
    %v1219 = vsel %vm364, %v1209, 0.0
    %1220 = vadd.xlane.f32.xlu0 %v1219
    %v1221 = vpop.xlane.xlu0 %1220
    %v1222 = vsel %vm364, %v1210, 0.0
    %1223 = vadd.xlane.f32.xlu0 %v1222
    %v1224 = vpop.xlane.xlu0 %1223
    %v1225 = vsel %vm364, %v1211, 0.0
    %1226 = vadd.xlane.f32.xlu0 %v1225
    %v1227 = vpop.xlane.xlu0 %1226
    %v1228 = vsel %vm364, %v1212, 0.0
    %1229 = vadd.xlane.f32.xlu0 %v1228
    %v1230 = vpop.xlane.xlu0 %1229
    %v1231 = vmax.f32 %v1215, 1e-20
    %v1232 = vmax.f32 %v1218, 1e-20
    %v1233 = vmax.f32 %v1221, 1e-20
    %v1234 = vmax.f32 %v1224, 1e-20
    %v1235 = vmax.f32 %v1227, 1e-20
    %v1236 = vmax.f32 %v1230, 1e-20
    %v1237 = vrcp.pop %v1231
    %v1238 = vrcp.pop %v1232
    %v1239 = vrcp.pop %v1233
    %v1240 = vrcp.pop %v1234
    %v1241 = vrcp.pop %v1235
    %v1242 = vrcp.pop %v1236
    %v1243 = vmul.f32 %v1207, %v1237
    %v1244 = vmul.f32 %v1208, %v1238
    %v1245 = vmul.f32 %v1209, %v1239
    %v1246 = vmul.f32 %v1210, %v1240
    %v1247 = vmul.f32 %v1211, %v1241
    %v1248 = vmul.f32 %v1212, %v1242
    %v1249 = vadd.f32 %v1201, %v1243
    %v1250 = vadd.f32 %v1202, %v1244
    %v1251 = vadd.f32 %v1203, %v1245
    %v1252 = vadd.f32 %v1204, %v1246
    %v1253 = vadd.f32 %v1205, %v1247
    %v1254 = vadd.f32 %v1206, %v1248
    %v1255 = vmul.f32 %v1148, %v112
    %v1256 = vmul.f32 %v1150, %v113
    %v1257 = vmul.f32 %v1152, %v114
    %v1258 = vmul.f32 %v1154, %v115
    %v1259 = vmul.f32 %v1156, %v116
    %v1260 = vmul.f32 %v1158, %v117
    %v1261 = vsel %vm364, %v1255, 0.0
    %1262 = vadd.xlane.f32.xlu0 %v1261
    %v1263 = vpop.xlane.xlu0 %1262
    %v1264 = vsel %vm364, %v1256, 0.0
    %1265 = vadd.xlane.f32.xlu0 %v1264
    %v1266 = vpop.xlane.xlu0 %1265
    %v1267 = vsel %vm364, %v1257, 0.0
    %1268 = vadd.xlane.f32.xlu0 %v1267
    %v1269 = vpop.xlane.xlu0 %1268
    %v1270 = vsel %vm364, %v1258, 0.0
    %1271 = vadd.xlane.f32.xlu0 %v1270
    %v1272 = vpop.xlane.xlu0 %1271
    %v1273 = vsel %vm364, %v1259, 0.0
    %1274 = vadd.xlane.f32.xlu0 %v1273
    %v1275 = vpop.xlane.xlu0 %1274
    %v1276 = vsel %vm364, %v1260, 0.0
    %1277 = vadd.xlane.f32.xlu0 %v1276
    %v1278 = vpop.xlane.xlu0 %1277
    %v1279 = vmax.f32 %v1263, 1e-20
    %v1280 = vmax.f32 %v1266, 1e-20
    %v1281 = vmax.f32 %v1269, 1e-20
    %v1282 = vmax.f32 %v1272, 1e-20
    %v1283 = vmax.f32 %v1275, 1e-20
    %v1284 = vmax.f32 %v1278, 1e-20
    %v1285 = vrcp.pop %v1279
    %v1286 = vrcp.pop %v1280
    %v1287 = vrcp.pop %v1281
    %v1288 = vrcp.pop %v1282
    %v1289 = vrcp.pop %v1283
    %v1290 = vrcp.pop %v1284
    %v1291 = vmul.f32 %v1255, %v1285
    %v1292 = vmul.f32 %v1256, %v1286
    %v1293 = vmul.f32 %v1257, %v1287
    %v1294 = vmul.f32 %v1258, %v1288
    %v1295 = vmul.f32 %v1259, %v1289
    %v1296 = vmul.f32 %v1260, %v1290
    %v1297 = vadd.f32 %v1249, %v1291
    %v1298 = vadd.f32 %v1250, %v1292
    %v1299 = vadd.f32 %v1251, %v1293
    %v1300 = vadd.f32 %v1252, %v1294
    %v1301 = vadd.f32 %v1253, %v1295
    %v1302 = vadd.f32 %v1254, %v1296
    %v1303 = vmul.f32 %v1148, %v125
    %v1304 = vmul.f32 %v1150, %v126
    %v1305 = vmul.f32 %v1152, %v127
    %v1306 = vmul.f32 %v1154, %v128
    %v1307 = vmul.f32 %v1156, %v129
    %v1308 = vmul.f32 %v1158, %v130
    %v1309 = vsel %vm364, %v1303, 0.0
    %1310 = vadd.xlane.f32.xlu0 %v1309
    %v1311 = vpop.xlane.xlu0 %1310
    %v1312 = vsel %vm364, %v1304, 0.0
    %1313 = vadd.xlane.f32.xlu0 %v1312
    %v1314 = vpop.xlane.xlu0 %1313
    %v1315 = vsel %vm364, %v1305, 0.0
    %1316 = vadd.xlane.f32.xlu0 %v1315
    %v1317 = vpop.xlane.xlu0 %1316
    %v1318 = vsel %vm364, %v1306, 0.0
    %1319 = vadd.xlane.f32.xlu0 %v1318
    %v1320 = vpop.xlane.xlu0 %1319
    %v1321 = vsel %vm364, %v1307, 0.0
    %1322 = vadd.xlane.f32.xlu0 %v1321
    %v1323 = vpop.xlane.xlu0 %1322
    %v1324 = vsel %vm364, %v1308, 0.0
    %1325 = vadd.xlane.f32.xlu0 %v1324
    %v1326 = vpop.xlane.xlu0 %1325
    %v1327 = vmax.f32 %v1311, 1e-20
    %v1328 = vmax.f32 %v1314, 1e-20
    %v1329 = vmax.f32 %v1317, 1e-20
    %v1330 = vmax.f32 %v1320, 1e-20
    %v1331 = vmax.f32 %v1323, 1e-20
    %v1332 = vmax.f32 %v1326, 1e-20
    %v1333 = vrcp.pop %v1327
    %v1334 = vrcp.pop %v1328
    %v1335 = vrcp.pop %v1329
    %v1336 = vrcp.pop %v1330
    %v1337 = vrcp.pop %v1331
    %v1338 = vrcp.pop %v1332
    %v1339 = vmul.f32 %v1303, %v1333
    %v1340 = vmul.f32 %v1304, %v1334
    %v1341 = vmul.f32 %v1305, %v1335
    %v1342 = vmul.f32 %v1306, %v1336
    %v1343 = vmul.f32 %v1307, %v1337
    %v1344 = vmul.f32 %v1308, %v1338
    %v1345 = vadd.f32 %v1297, %v1339
    %v1346 = vadd.f32 %v1298, %v1340
    %v1347 = vadd.f32 %v1299, %v1341
    %v1348 = vadd.f32 %v1300, %v1342
    %v1349 = vadd.f32 %v1301, %v1343
    %v1350 = vadd.f32 %v1302, %v1344
    %v1351 = vmul.f32 %v1148, %v138
    %v1352 = vmul.f32 %v1150, %v139
    %v1353 = vmul.f32 %v1152, %v140
    %v1354 = vmul.f32 %v1154, %v141
    %v1355 = vmul.f32 %v1156, %v142
    %v1356 = vmul.f32 %v1158, %v143
    %v1357 = vsel %vm364, %v1351, 0.0
    %1358 = vadd.xlane.f32.xlu0 %v1357
    %v1359 = vpop.xlane.xlu0 %1358
    %v1360 = vsel %vm364, %v1352, 0.0
    %1361 = vadd.xlane.f32.xlu0 %v1360
    %v1362 = vpop.xlane.xlu0 %1361
    %v1363 = vsel %vm364, %v1353, 0.0
    %1364 = vadd.xlane.f32.xlu0 %v1363
    %v1365 = vpop.xlane.xlu0 %1364
    %v1366 = vsel %vm364, %v1354, 0.0
    %1367 = vadd.xlane.f32.xlu0 %v1366
    %v1368 = vpop.xlane.xlu0 %1367
    %v1369 = vsel %vm364, %v1355, 0.0
    %1370 = vadd.xlane.f32.xlu0 %v1369
    %v1371 = vpop.xlane.xlu0 %1370
    %v1372 = vsel %vm364, %v1356, 0.0
    %1373 = vadd.xlane.f32.xlu0 %v1372
    %v1374 = vpop.xlane.xlu0 %1373
    %v1375 = vmax.f32 %v1359, 1e-20
    %v1376 = vmax.f32 %v1362, 1e-20
    %v1377 = vmax.f32 %v1365, 1e-20
    %v1378 = vmax.f32 %v1368, 1e-20
    %v1379 = vmax.f32 %v1371, 1e-20
    %v1380 = vmax.f32 %v1374, 1e-20
    %v1381 = vrcp.pop %v1375
    %v1382 = vrcp.pop %v1376
    %v1383 = vrcp.pop %v1377
    %v1384 = vrcp.pop %v1378
    %v1385 = vrcp.pop %v1379
    %v1386 = vrcp.pop %v1380
    %v1387 = vmul.f32 %v1351, %v1381
    %v1388 = vmul.f32 %v1352, %v1382
    %v1389 = vmul.f32 %v1353, %v1383
    %v1390 = vmul.f32 %v1354, %v1384
    %v1391 = vmul.f32 %v1355, %v1385
    %v1392 = vmul.f32 %v1356, %v1386
    %v1393 = vadd.f32 %v1345, %v1387
    %v1394 = vadd.f32 %v1346, %v1388
    %v1395 = vadd.f32 %v1347, %v1389
    %v1396 = vadd.f32 %v1348, %v1390
    %v1397 = vadd.f32 %v1349, %v1391
    %v1398 = vadd.f32 %v1350, %v1392
    %v1399 = vmul.f32 %v1148, %v151
    %v1400 = vmul.f32 %v1150, %v152
    %v1401 = vmul.f32 %v1152, %v153
    %v1402 = vmul.f32 %v1154, %v154
    %v1403 = vmul.f32 %v1156, %v155
    %v1404 = vmul.f32 %v1158, %v156
    %v1405 = vsel %vm364, %v1399, 0.0
    %1406 = vadd.xlane.f32.xlu0 %v1405
    %v1407 = vpop.xlane.xlu0 %1406
    %v1408 = vsel %vm364, %v1400, 0.0
    %1409 = vadd.xlane.f32.xlu0 %v1408
    %v1410 = vpop.xlane.xlu0 %1409
    %v1411 = vsel %vm364, %v1401, 0.0
    %1412 = vadd.xlane.f32.xlu0 %v1411
    %v1413 = vpop.xlane.xlu0 %1412
    %v1414 = vsel %vm364, %v1402, 0.0
    %1415 = vadd.xlane.f32.xlu0 %v1414
    %v1416 = vpop.xlane.xlu0 %1415
    %v1417 = vsel %vm364, %v1403, 0.0
    %1418 = vadd.xlane.f32.xlu0 %v1417
    %v1419 = vpop.xlane.xlu0 %1418
    %v1420 = vsel %vm364, %v1404, 0.0
    %1421 = vadd.xlane.f32.xlu0 %v1420
    %v1422 = vpop.xlane.xlu0 %1421
    %v1423 = vmax.f32 %v1407, 1e-20
    %v1424 = vmax.f32 %v1410, 1e-20
    %v1425 = vmax.f32 %v1413, 1e-20
    %v1426 = vmax.f32 %v1416, 1e-20
    %v1427 = vmax.f32 %v1419, 1e-20
    %v1428 = vmax.f32 %v1422, 1e-20
    %v1429 = vrcp.pop %v1423
    %v1430 = vrcp.pop %v1424
    %v1431 = vrcp.pop %v1425
    %v1432 = vrcp.pop %v1426
    %v1433 = vrcp.pop %v1427
    %v1434 = vrcp.pop %v1428
    %v1435 = vmul.f32 %v1399, %v1429
    %v1436 = vmul.f32 %v1400, %v1430
    %v1437 = vmul.f32 %v1401, %v1431
    %v1438 = vmul.f32 %v1402, %v1432
    %v1439 = vmul.f32 %v1403, %v1433
    %v1440 = vmul.f32 %v1404, %v1434
    %v1441 = vadd.f32 %v1393, %v1435
    %v1442 = vadd.f32 %v1394, %v1436
    %v1443 = vadd.f32 %v1395, %v1437
    %v1444 = vadd.f32 %v1396, %v1438
    %v1445 = vadd.f32 %v1397, %v1439
    %v1446 = vadd.f32 %v1398, %v1440
    %v1447 = vmul.f32 %v1148, %v164
    %v1448 = vmul.f32 %v1150, %v165
    %v1449 = vmul.f32 %v1152, %v166
    %v1450 = vmul.f32 %v1154, %v167
    %v1451 = vmul.f32 %v1156, %v168
    %v1452 = vmul.f32 %v1158, %v169
    %v1453 = vsel %vm364, %v1447, 0.0
    %1454 = vadd.xlane.f32.xlu0 %v1453
    %v1455 = vpop.xlane.xlu0 %1454
    %v1456 = vsel %vm364, %v1448, 0.0
    %1457 = vadd.xlane.f32.xlu0 %v1456
    %v1458 = vpop.xlane.xlu0 %1457
    %v1459 = vsel %vm364, %v1449, 0.0
    %1460 = vadd.xlane.f32.xlu0 %v1459
    %v1461 = vpop.xlane.xlu0 %1460
    %v1462 = vsel %vm364, %v1450, 0.0
    %1463 = vadd.xlane.f32.xlu0 %v1462
    %v1464 = vpop.xlane.xlu0 %1463
    %v1465 = vsel %vm364, %v1451, 0.0
    %1466 = vadd.xlane.f32.xlu0 %v1465
    %v1467 = vpop.xlane.xlu0 %1466
    %v1468 = vsel %vm364, %v1452, 0.0
    %1469 = vadd.xlane.f32.xlu0 %v1468
    %v1470 = vpop.xlane.xlu0 %1469
    %v1471 = vmax.f32 %v1455, 1e-20
    %v1472 = vmax.f32 %v1458, 1e-20
    %v1473 = vmax.f32 %v1461, 1e-20
    %v1474 = vmax.f32 %v1464, 1e-20
    %v1475 = vmax.f32 %v1467, 1e-20
    %v1476 = vmax.f32 %v1470, 1e-20
    %v1477 = vrcp.pop %v1471
    %v1478 = vrcp.pop %v1472
    %v1479 = vrcp.pop %v1473
    %v1480 = vrcp.pop %v1474
    %v1481 = vrcp.pop %v1475
    %v1482 = vrcp.pop %v1476
    %v1483 = vmul.f32 %v1447, %v1477
    %v1484 = vmul.f32 %v1448, %v1478
    %v1485 = vmul.f32 %v1449, %v1479
    %v1486 = vmul.f32 %v1450, %v1480
    %v1487 = vmul.f32 %v1451, %v1481
    %v1488 = vmul.f32 %v1452, %v1482
    %v1489 = vadd.f32 %v1441, %v1483
    %v1490 = vadd.f32 %v1442, %v1484
    %v1491 = vadd.f32 %v1443, %v1485
    %v1492 = vadd.f32 %v1444, %v1486
    %v1493 = vadd.f32 %v1445, %v1487
    %v1494 = vadd.f32 %v1446, %v1488
    %v1495 = vmul.f32 %v1148, %v177
    %v1496 = vmul.f32 %v1150, %v178
    %v1497 = vmul.f32 %v1152, %v179
    %v1498 = vmul.f32 %v1154, %v180
    %v1499 = vmul.f32 %v1156, %v181
    %v1500 = vmul.f32 %v1158, %v182
    %v1501 = vsel %vm364, %v1495, 0.0
    %1502 = vadd.xlane.f32.xlu0 %v1501
    %v1503 = vpop.xlane.xlu0 %1502
    %v1504 = vsel %vm364, %v1496, 0.0
    %1505 = vadd.xlane.f32.xlu0 %v1504
    %v1506 = vpop.xlane.xlu0 %1505
    %v1507 = vsel %vm364, %v1497, 0.0
    %1508 = vadd.xlane.f32.xlu0 %v1507
    %v1509 = vpop.xlane.xlu0 %1508
    %v1510 = vsel %vm364, %v1498, 0.0
    %1511 = vadd.xlane.f32.xlu0 %v1510
    %v1512 = vpop.xlane.xlu0 %1511
    %v1513 = vsel %vm364, %v1499, 0.0
    %1514 = vadd.xlane.f32.xlu0 %v1513
    %v1515 = vpop.xlane.xlu0 %1514
    %v1516 = vsel %vm364, %v1500, 0.0
    %1517 = vadd.xlane.f32.xlu0 %v1516
    %v1518 = vpop.xlane.xlu0 %1517
    %v1519 = vmax.f32 %v1503, 1e-20
    %v1520 = vmax.f32 %v1506, 1e-20
    %v1521 = vmax.f32 %v1509, 1e-20
    %v1522 = vmax.f32 %v1512, 1e-20
    %v1523 = vmax.f32 %v1515, 1e-20
    %v1524 = vmax.f32 %v1518, 1e-20
    %v1525 = vrcp.pop %v1519
    %v1526 = vrcp.pop %v1520
    %v1527 = vrcp.pop %v1521
    %v1528 = vrcp.pop %v1522
    %v1529 = vrcp.pop %v1523
    %v1530 = vrcp.pop %v1524
    %v1531 = vmul.f32 %v1495, %v1525
    %v1532 = vmul.f32 %v1496, %v1526
    %v1533 = vmul.f32 %v1497, %v1527
    %v1534 = vmul.f32 %v1498, %v1528
    %v1535 = vmul.f32 %v1499, %v1529
    %v1536 = vmul.f32 %v1500, %v1530
    %v1537 = vadd.f32 %v1489, %v1531
    %v1538 = vadd.f32 %v1490, %v1532
    %v1539 = vadd.f32 %v1491, %v1533
    %v1540 = vadd.f32 %v1492, %v1534
    %v1541 = vadd.f32 %v1493, %v1535
    %v1542 = vadd.f32 %v1494, %v1536
    %v1543 = vmul.f32 %v1148, %v190
    %v1544 = vmul.f32 %v1150, %v191
    %v1545 = vmul.f32 %v1152, %v192
    %v1546 = vmul.f32 %v1154, %v193
    %v1547 = vmul.f32 %v1156, %v194
    %v1548 = vmul.f32 %v1158, %v195
    %v1549 = vsel %vm364, %v1543, 0.0
    %1550 = vadd.xlane.f32.xlu0 %v1549
    %v1551 = vpop.xlane.xlu0 %1550
    %v1552 = vsel %vm364, %v1544, 0.0
    %1553 = vadd.xlane.f32.xlu0 %v1552
    %v1554 = vpop.xlane.xlu0 %1553
    %v1555 = vsel %vm364, %v1545, 0.0
    %1556 = vadd.xlane.f32.xlu0 %v1555
    %v1557 = vpop.xlane.xlu0 %1556
    %v1558 = vsel %vm364, %v1546, 0.0
    %1559 = vadd.xlane.f32.xlu0 %v1558
    %v1560 = vpop.xlane.xlu0 %1559
    %v1561 = vsel %vm364, %v1547, 0.0
    %1562 = vadd.xlane.f32.xlu0 %v1561
    %v1563 = vpop.xlane.xlu0 %1562
    %v1564 = vsel %vm364, %v1548, 0.0
    %1565 = vadd.xlane.f32.xlu0 %v1564
    %v1566 = vpop.xlane.xlu0 %1565
    %v1567 = vmax.f32 %v1551, 1e-20
    %v1568 = vmax.f32 %v1554, 1e-20
    %v1569 = vmax.f32 %v1557, 1e-20
    %v1570 = vmax.f32 %v1560, 1e-20
    %v1571 = vmax.f32 %v1563, 1e-20
    %v1572 = vmax.f32 %v1566, 1e-20
    %v1573 = vrcp.pop %v1567
    %v1574 = vrcp.pop %v1568
    %v1575 = vrcp.pop %v1569
    %v1576 = vrcp.pop %v1570
    %v1577 = vrcp.pop %v1571
    %v1578 = vrcp.pop %v1572
    %v1579 = vmul.f32 %v1543, %v1573
    %v1580 = vmul.f32 %v1544, %v1574
    %v1581 = vmul.f32 %v1545, %v1575
    %v1582 = vmul.f32 %v1546, %v1576
    %v1583 = vmul.f32 %v1547, %v1577
    %v1584 = vmul.f32 %v1548, %v1578
    %v1585 = vadd.f32 %v1537, %v1579
    %v1586 = vadd.f32 %v1538, %v1580
    %v1587 = vadd.f32 %v1539, %v1581
    %v1588 = vadd.f32 %v1540, %v1582
    %v1589 = vadd.f32 %v1541, %v1583
    %v1590 = vadd.f32 %v1542, %v1584
    %v1591 = vmul.f32 %v1148, %v203
    %v1592 = vmul.f32 %v1150, %v204
    %v1593 = vmul.f32 %v1152, %v205
    %v1594 = vmul.f32 %v1154, %v206
    %v1595 = vmul.f32 %v1156, %v207
    %v1596 = vmul.f32 %v1158, %v208
    %v1597 = vsel %vm364, %v1591, 0.0
    %1598 = vadd.xlane.f32.xlu0 %v1597
    %v1599 = vpop.xlane.xlu0 %1598
    %v1600 = vsel %vm364, %v1592, 0.0
    %1601 = vadd.xlane.f32.xlu0 %v1600
    %v1602 = vpop.xlane.xlu0 %1601
    %v1603 = vsel %vm364, %v1593, 0.0
    %1604 = vadd.xlane.f32.xlu0 %v1603
    %v1605 = vpop.xlane.xlu0 %1604
    %v1606 = vsel %vm364, %v1594, 0.0
    %1607 = vadd.xlane.f32.xlu0 %v1606
    %v1608 = vpop.xlane.xlu0 %1607
    %v1609 = vsel %vm364, %v1595, 0.0
    %1610 = vadd.xlane.f32.xlu0 %v1609
    %v1611 = vpop.xlane.xlu0 %1610
    %v1612 = vsel %vm364, %v1596, 0.0
    %1613 = vadd.xlane.f32.xlu0 %v1612
    %v1614 = vpop.xlane.xlu0 %1613
    %v1615 = vmax.f32 %v1599, 1e-20
    %v1616 = vmax.f32 %v1602, 1e-20
    %v1617 = vmax.f32 %v1605, 1e-20
    %v1618 = vmax.f32 %v1608, 1e-20
    %v1619 = vmax.f32 %v1611, 1e-20
    %v1620 = vmax.f32 %v1614, 1e-20
    %v1621 = vrcp.pop %v1615
    %v1622 = vrcp.pop %v1616
    %v1623 = vrcp.pop %v1617
    %v1624 = vrcp.pop %v1618
    %v1625 = vrcp.pop %v1619
    %v1626 = vrcp.pop %v1620
    %v1627 = vmul.f32 %v1591, %v1621
    %v1628 = vmul.f32 %v1592, %v1622
    %v1629 = vmul.f32 %v1593, %v1623
    %v1630 = vmul.f32 %v1594, %v1624
    %v1631 = vmul.f32 %v1595, %v1625
    %v1632 = vmul.f32 %v1596, %v1626
    %v1633 = vadd.f32 %v1585, %v1627
    %v1634 = vadd.f32 %v1586, %v1628
    %v1635 = vadd.f32 %v1587, %v1629
    %v1636 = vadd.f32 %v1588, %v1630
    %v1637 = vadd.f32 %v1589, %v1631
    %v1638 = vadd.f32 %v1590, %v1632
    %v1640 = vsel %vm364, %v1633, 0
    %v1643 = vsel %vm364, %v1634, 0
    %v1646 = vsel %vm364, %v1635, 0
    %v1649 = vsel %vm364, %v1636, 0
    %v1652 = vsel %vm364, %v1637, 0
    %v1655 = vsel %vm364, %v1638, 0
    %1657 = vmatpush.msra.mxu0 0.0
    %1658 = vmatpush.msra.mxu0 0.0
    %1659 = vmatpush.msra.mxu0 0.0
    %1660 = vmatpush.msra.mxu0 0.0
    %1661 = vmatpush.msra.mxu0 0.0
    %1662 = vmatpush.msra.mxu0 0.0
    %1663 = vmatpush.msra.mxu0 0.0
    %1664 = vmatpush.msra.mxu0 0.0
    %1665 = vmatpush.msra.mxu0 0.0
    %1666 = vmatpush.msra.mxu0 0.0
    %1667 = vmatpush.msra.mxu0 %v1049
    %1668 = vmatpush.msra.mxu0 %v1046
    %1669 = vmatpush.msra.mxu0 %v1043
    %1670 = vmatpush.msra.mxu0 %v1040
    %1671 = vmatpush.msra.mxu0 %v1037
    %1672 = vmatpush.msra.mxu0 %v1034
    %1673 = vmatmul.f32.gmra.mxu0 %v1640
    %v1674 = vpop.f32.mrf.mxu0
    %v1675 = vadd.f32 0.0, %v1674
    %1676 = vmatmul.f32.gmra.mxu0 %v1643
    %v1677 = vpop.f32.mrf.mxu0
    %v1678 = vadd.f32 0.0, %v1677
    %1679 = vmatmul.f32.gmra.mxu0 %v1646
    %v1680 = vpop.f32.mrf.mxu0
    %v1681 = vadd.f32 0.0, %v1680
    %1682 = vmatmul.f32.gmra.mxu0 %v1649
    %v1683 = vpop.f32.mrf.mxu0
    %v1684 = vadd.f32 0.0, %v1683
    %1685 = vmatmul.f32.gmra.mxu0 %v1652
    %v1686 = vpop.f32.mrf.mxu0
    %v1687 = vadd.f32 0.0, %v1686
    %1688 = vmatmul.f32.gmra.mxu0 %v1655
    %v1689 = vpop.f32.mrf.mxu0
    %v1690 = vadd.f32 0.0, %v1689
    %1691 = vdwg.mxu0
    %v1692 = vmul.f32 %v1675, %v937
    %v1693 = vmul.f32 %v1678, %v942
    %v1694 = vmul.f32 %v1681, %v947
    %v1695 = vmul.f32 %v1684, %v952
    %v1696 = vmul.f32 %v1687, %v957
    %v1697 = vmul.f32 %v1690, %v962
    %v1699 = vperm.slane %v1015, 0
    %v1701 = vadd.f32 %v1692, %v1699
    %v1702 = vadd.f32 %v1693, %v1699
    %v1703 = vadd.f32 %v1694, %v1699
    %v1704 = vadd.f32 %v1695, %v1699
    %v1705 = vadd.f32 %v1696, %v1699
    %v1706 = vadd.f32 %v1697, %v1699
    %vm1707 = vcmp.gt.f32.partialorder %v1701, 0.0
    %vm1708 = vcmp.gt.f32.partialorder %v1702, 0.0
    %vm1709 = vcmp.gt.f32.partialorder %v1703, 0.0
    %vm1710 = vcmp.gt.f32.partialorder %v1704, 0.0
    %vm1711 = vcmp.gt.f32.partialorder %v1705, 0.0
    %vm1712 = vcmp.gt.f32.partialorder %v1706, 0.0
    %v1713 = vmul.f32 %v1701, 0.01
    %v1714 = vmul.f32 %v1702, 0.01
    %v1715 = vmul.f32 %v1703, 0.01
    %v1716 = vmul.f32 %v1704, 0.01
    %v1717 = vmul.f32 %v1705, 0.01
    %v1718 = vmul.f32 %v1706, 0.01
    %v1719 = vsel %vm1707, %v1701, %v1713
    %v1720 = vsel %vm1708, %v1702, %v1714
    %v1721 = vsel %vm1709, %v1703, %v1715
    %v1722 = vsel %vm1710, %v1704, %v1716
    %v1723 = vsel %vm1711, %v1705, %v1717
    %v1724 = vsel %vm1712, %v1706, %v1718
    %v1725 = vld [vmem:[%s3] sm:$0x3]
    %v1727 = vsel %vm364, %v1725, 0
    %1729 = vmatpush.msra.mxu0 0.0
    %1730 = vmatpush.msra.mxu0 0.0
    %1731 = vmatpush.msra.mxu0 0.0
    %1732 = vmatpush.msra.mxu0 0.0
    %1733 = vmatpush.msra.mxu0 0.0
    %1734 = vmatpush.msra.mxu0 0.0
    %1735 = vmatpush.msra.mxu0 0.0
    %1736 = vmatpush.msra.mxu0 0.0
    %1737 = vmatpush.msra.mxu0 0.0
    %1738 = vmatpush.msra.mxu0 0.0
    %1739 = vmatpush.msra.mxu0 %v1724
    %1740 = vmatpush.msra.mxu0 %v1723
    %1741 = vmatpush.msra.mxu0 %v1722
    %1742 = vmatpush.msra.mxu0 %v1721
    %1743 = vmatpush.msra.mxu0 %v1720
    %1744 = vmatpush.msra.mxu0 %v1719
    %1745 = vmatmul.f32.gmra.mxu0 %v1727
    %v1746 = vpop.f32.mrf.mxu0
    %v1747 = vadd.f32 0.0, %v1746
    %1748 = vdwg.mxu0
    %v1749 = vld [vmem:[%s12] sm:$0xff]
    %v1750 = vld [vmem:[%s12 + $0x8] sm:$0xff]
    %v1751 = vld [vmem:[%s12 + $0x10] sm:$0xff]
    %v1752 = vld [vmem:[%s12 + $0x18] sm:$0xff]
    %v1753 = vld [vmem:[%s12 + $0x20] sm:$0xff]
    %v1754 = vld [vmem:[%s12 + $0x28] sm:$0xff]
    %v1755 = vld [vmem:[%s12 + $0x30] sm:$0xff]
    %v1756 = vld [vmem:[%s12 + $0x38] sm:$0xff]
    %v1757 = vld [vmem:[%s12 + $0x40] sm:$0xff]
    %v1758 = vld [vmem:[%s12 + $0x48] sm:$0xff]
    %v1759 = vld [vmem:[%s12 + $0x50] sm:$0xff]
    %v1760 = vld [vmem:[%s12 + $0x58] sm:$0xff]
    %v1761 = vld [vmem:[%s12 + $0x60] sm:$0xff]
    %v1762 = vld [vmem:[%s12 + $0x68] sm:$0xff]
    %v1763 = vld [vmem:[%s12 + $0x70] sm:$0xff]
    %v1764 = vld [vmem:[%s12 + $0x78] sm:$0xff]
    %v1765 = vld [vmem:[%s13] sm:$0x1]
    %v1767 = vperm.slane %v1765, 0
    %1769 = vmatpush.msra.mxu0 %v1764
    %1770 = vmatpush.msra.mxu0 %v1763
    %1771 = vmatpush.msra.mxu0 %v1762
    %1772 = vmatpush.msra.mxu0 %v1761
    %1773 = vmatpush.msra.mxu0 %v1760
    %1774 = vmatpush.msra.mxu0 %v1759
    %1775 = vmatpush.msra.mxu0 %v1758
    %1776 = vmatpush.msra.mxu0 %v1757
    %1777 = vmatpush.msra.mxu0 %v1756
    %1778 = vmatpush.msra.mxu0 %v1755
    %1779 = vmatpush.msra.mxu0 %v1754
    %1780 = vmatpush.msra.mxu0 %v1753
    %1781 = vmatpush.msra.mxu0 %v1752
    %1782 = vmatpush.msra.mxu0 %v1751
    %1783 = vmatpush.msra.mxu0 %v1750
    %1784 = vmatpush.msra.mxu0 %v1749
    %1785 = vmatmul.f32.gmra.mxu0 %v1747
    %v1786 = vpop.f32.mrf.mxu0
    %v1787 = vadd.f32 %v1767, %v1786
    %1788 = vdwg.mxu0
    %vm1789 = vcmp.gt.f32.partialorder %v1787, 0.0
    %v1790 = vmul.f32 %v1787, 0.01
    %v1791 = vsel %vm1789, %v1787, %v1790
    %v1792 = vld [vmem:[%s14] sm:$0xff]
    %v1793 = vld [vmem:[%s14 + $0x8] sm:$0xff]
    %v1794 = vld [vmem:[%s14 + $0x10] sm:$0xff]
    %v1795 = vld [vmem:[%s14 + $0x18] sm:$0xff]
    %v1796 = vld [vmem:[%s14 + $0x20] sm:$0xff]
    %v1797 = vld [vmem:[%s14 + $0x28] sm:$0xff]
    %v1798 = vld [vmem:[%s14 + $0x30] sm:$0xff]
    %v1799 = vld [vmem:[%s14 + $0x38] sm:$0xff]
    %v1800 = vld [vmem:[%s15] sm:$0x1]
    %v1802 = vperm.slane %v1800, 0
    %vm1804 = vcmask 523264
    %v1806 = vsel %vm1804, %v1791, 0
    %1808 = vmatpush.msra.mxu0 0.0
    %1809 = vmatpush.msra.mxu0 0.0
    %1810 = vmatpush.msra.mxu0 0.0
    %1811 = vmatpush.msra.mxu0 0.0
    %1812 = vmatpush.msra.mxu0 0.0
    %1813 = vmatpush.msra.mxu0 0.0
    %1814 = vmatpush.msra.mxu0 0.0
    %1815 = vmatpush.msra.mxu0 0.0
    %1816 = vmatpush.msra.mxu0 %v1799
    %1817 = vmatpush.msra.mxu0 %v1798
    %1818 = vmatpush.msra.mxu0 %v1797
    %1819 = vmatpush.msra.mxu0 %v1796
    %1820 = vmatpush.msra.mxu0 %v1795
    %1821 = vmatpush.msra.mxu0 %v1794
    %1822 = vmatpush.msra.mxu0 %v1793
    %1823 = vmatpush.msra.mxu0 %v1792
    %1824 = vmatmul.f32.gmra.mxu0 %v1806
    %v1825 = vpop.f32.mrf.mxu0
    %v1826 = vadd.f32 %v1802, %v1825
    %1827 = vdwg.mxu0
    %vm1828 = vcmp.gt.f32.partialorder %v1826, 0.0
    %v1829 = vmul.f32 %v1826, 0.01
    %v1830 = vsel %vm1828, %v1826, %v1829
    %v1831 = vadd.f32 %v1830, %v1747
    %v1832 = vld [vmem:[#allocation5] sm:$0xff]
    %v1833 = vld [vmem:[#allocation5 + $0x8] sm:$0xff]
    %v1834 = vld [vmem:[#allocation5 + $0x10] sm:$0xff]
    %v1835 = vld [vmem:[#allocation5 + $0x18] sm:$0xff]
    %v1836 = vld [vmem:[#allocation5 + $0x20] sm:$0xff]
    %v1837 = vld [vmem:[#allocation5 + $0x28] sm:$0xff]
    %v1838 = vld [vmem:[#allocation5 + $0x30] sm:$0xff]
    %v1839 = vld [vmem:[#allocation5 + $0x38] sm:$0xff]
    %v1840 = vld [vmem:[#allocation5 + $0x40] sm:$0xff]
    %v1841 = vld [vmem:[#allocation5 + $0x48] sm:$0xff]
    %v1842 = vld [vmem:[#allocation5 + $0x50] sm:$0xff]
    %v1843 = vld [vmem:[#allocation5 + $0x58] sm:$0xff]
    %v1844 = vld [vmem:[#allocation5 + $0x60] sm:$0xff]
    %v1845 = vld [vmem:[#allocation5 + $0x68] sm:$0xff]
    %v1846 = vld [vmem:[#allocation5 + $0x70] sm:$0xff]
    %v1847 = vld [vmem:[#allocation5 + $0x78] sm:$0xff]
    %v1848 = vld [vmem:[#allocation5 + $0x80] sm:$0xff]
    %v1849 = vld [vmem:[#allocation5 + $0x88] sm:$0xff]
    %v1850 = vld [vmem:[#allocation5 + $0x90] sm:$0xff]
    %v1851 = vld [vmem:[#allocation5 + $0x98] sm:$0xff]
    %v1852 = vld [vmem:[#allocation5 + $0xa0] sm:$0xff]
    %v1853 = vld [vmem:[#allocation5 + $0xa8] sm:$0xff]
    %v1854 = vld [vmem:[#allocation5 + $0xb0] sm:$0xff]
    %v1855 = vld [vmem:[#allocation5 + $0xb8] sm:$0xff]
    %v1856 = vld [vmem:[#allocation5 + $0xc0] sm:$0xff]
    %v1857 = vld [vmem:[#allocation5 + $0xc8] sm:$0xff]
    %v1858 = vld [vmem:[#allocation5 + $0xd0] sm:$0xff]
    %v1859 = vld [vmem:[#allocation5 + $0xd8] sm:$0xff]
    %v1860 = vld [vmem:[#allocation5 + $0xe0] sm:$0xff]
    %v1861 = vld [vmem:[#allocation5 + $0xe8] sm:$0xff]
    %v1862 = vld [vmem:[#allocation5 + $0xf0] sm:$0xff]
    %v1863 = vld [vmem:[#allocation5 + $0xf8] sm:$0xff]
    %v1864 = vld [vmem:[#allocation5 + $0x100] sm:$0xff]
    %v1865 = vld [vmem:[#allocation5 + $0x108] sm:$0xff]
    %v1866 = vld [vmem:[#allocation5 + $0x110] sm:$0xff]
    %v1867 = vld [vmem:[#allocation5 + $0x118] sm:$0xff]
    %v1868 = vld [vmem:[#allocation5 + $0x120] sm:$0xff]
    %v1869 = vld [vmem:[#allocation5 + $0x128] sm:$0xff]
    %v1870 = vld [vmem:[#allocation5 + $0x130] sm:$0xff]
    %v1871 = vld [vmem:[#allocation5 + $0x138] sm:$0xff]
    %v1872 = vld [vmem:[#allocation5 + $0x140] sm:$0xff]
    %v1873 = vld [vmem:[#allocation5 + $0x148] sm:$0xff]
    %v1874 = vld [vmem:[#allocation5 + $0x150] sm:$0xff]
    %v1875 = vld [vmem:[#allocation5 + $0x158] sm:$0xff]
    %v1876 = vld [vmem:[#allocation5 + $0x160] sm:$0xff]
    %v1877 = vld [vmem:[#allocation5 + $0x168] sm:$0xff]
    %v1878 = vld [vmem:[#allocation5 + $0x170] sm:$0xff]
    %v1879 = vld [vmem:[#allocation5 + $0x178] sm:$0xff]
    %v1880 = vld [vmem:[%s17] sm:$0x7]
    %v1882 = vperm.slane %v1880, 0
    %v1883 = vperm.slane %v1880, 1
    %v1884 = vperm.slane %v1880, 2
    %1888 = vmatpush.msra.mxu0 %v1877
    %1889 = vmatpush.msra.mxu0 %v1874
    %1890 = vmatpush.msra.mxu0 %v1871
    %1891 = vmatpush.msra.mxu0 %v1868
    %1892 = vmatpush.msra.mxu0 %v1865
    %1893 = vmatpush.msra.mxu0 %v1862
    %1894 = vmatpush.msra.mxu0 %v1859
    %1895 = vmatpush.msra.mxu0 %v1856
    %1896 = vmatpush.msra.mxu0 %v1853
    %1897 = vmatpush.msra.mxu0 %v1850
    %1898 = vmatpush.msra.mxu0 %v1847
    %1899 = vmatpush.msra.mxu0 %v1844
    %1900 = vmatpush.msra.mxu0 %v1841
    %1901 = vmatpush.msra.mxu0 %v1838
    %1902 = vmatpush.msra.mxu0 %v1835
    %1903 = vmatpush.msra.mxu0 %v1832
    %1904 = vmatmul.f32.gmra.mxu0 %v1831
    %v1905 = vpop.f32.mrf.mxu0
    %v1906 = vadd.f32 %v1882, %v1905
    %1907 = vdwg.mxu0
    %1908 = vmatpush.msra.mxu0 %v1878
    %1909 = vmatpush.msra.mxu0 %v1875
    %1910 = vmatpush.msra.mxu0 %v1872
    %1911 = vmatpush.msra.mxu0 %v1869
    %1912 = vmatpush.msra.mxu0 %v1866
    %1913 = vmatpush.msra.mxu0 %v1863
    %1914 = vmatpush.msra.mxu0 %v1860
    %1915 = vmatpush.msra.mxu0 %v1857
    %1916 = vmatpush.msra.mxu0 %v1854
    %1917 = vmatpush.msra.mxu0 %v1851
    %1918 = vmatpush.msra.mxu0 %v1848
    %1919 = vmatpush.msra.mxu0 %v1845
    %1920 = vmatpush.msra.mxu0 %v1842
    %1921 = vmatpush.msra.mxu0 %v1839
    %1922 = vmatpush.msra.mxu0 %v1836
    %1923 = vmatpush.msra.mxu0 %v1833
    %1924 = vmatmul.f32.gmra.mxu0 %v1831
    %v1925 = vpop.f32.mrf.mxu0
    %v1926 = vadd.f32 %v1883, %v1925
    %1927 = vdwg.mxu0
    %1928 = vmatpush.msra.mxu0 %v1879
    %1929 = vmatpush.msra.mxu0 %v1876
    %1930 = vmatpush.msra.mxu0 %v1873
    %1931 = vmatpush.msra.mxu0 %v1870
    %1932 = vmatpush.msra.mxu0 %v1867
    %1933 = vmatpush.msra.mxu0 %v1864
    %1934 = vmatpush.msra.mxu0 %v1861
    %1935 = vmatpush.msra.mxu0 %v1858
    %1936 = vmatpush.msra.mxu0 %v1855
    %1937 = vmatpush.msra.mxu0 %v1852
    %1938 = vmatpush.msra.mxu0 %v1849
    %1939 = vmatpush.msra.mxu0 %v1846
    %1940 = vmatpush.msra.mxu0 %v1843
    %1941 = vmatpush.msra.mxu0 %v1840
    %1942 = vmatpush.msra.mxu0 %v1837
    %1943 = vmatpush.msra.mxu0 %v1834
    %1944 = vmatmul.f32.gmra.mxu0 %v1831
    %v1945 = vpop.f32.mrf.mxu0
    %v1946 = vadd.f32 %v1884, %v1945
    %1947 = vdwg.mxu0
    %v1951 = vrot.slane %v1926, 6
    %v1952 = vrot.slane %v1946, 4
    %vm1953 = vcmask 1041408
    %v1954 = vsel %vm1953, %v1906, %v1951
    %vm1955 = vcmask 1043456
    %v1956 = vsel %vm1955, %v1954, %v1952
    %1958 = vst [vmem:[#allocation7] sm:$0x3f] %v1956
    // Predicated region
    $region82: #{tpu_custom_call.1} parent=1 // pred_check
      _
    $region83: #{tpu_custom_call.1} parent=1 // pred_check_branch
      %1960 = sbr.rel (0) target = $region85
    $region84: #{tpu_custom_call.1} parent=1 // pred_region
      %1962 = vsyncadd [#allocation4], 0
      %s1964 = sshll.u32 [#allocation7], 4
      %s1965 = int_to_ptr.vmem [resolvable:$true] %s1964
      %s1966 = sshll.u32 %s18, 4
      %s1967 = int_to_ptr.hbm [resolvable:$true] %s1966
      %1969 = dma.vmem_to_hbm [thread:$0]  %s1965, 96, %s1967, [#allocation4]
    $region85: #{tpu_custom_call.1} parent=1 // pred_fallthru
      _
    // Predicated region
    $region86: #{tpu_custom_call.1} parent=1 // pred_check
      _
    $region87: #{tpu_custom_call.1} parent=1 // pred_check_branch
      %1971 = sbr.rel (0) target = $region89
    $region88: #{tpu_custom_call.1} parent=1 // pred_region
      %1973 = dma.done [#allocation4], 96
    $region89: #{tpu_custom_call.1} parent=1 // pred_fallthru
      _
    %1974 = vsyncpa [#allocation3], 1
    %1975 = vsyncpa [#allocation6], 1
    %1976 = vsyncpa [#allocation4], 1

</llo_original>
